<compile_context>
chip_gen: v6e
topology: v6e:2x2x1
jax: 0.10.0
libtpu: 0.0.40
codegen_flags: <defaults>
</compile_context>

<pallas_src>
import functools

import jax
import jax.numpy as jnp
from jax import lax
from jax.experimental import pallas as pl
from jax.experimental.pallas import tpu as pltpu

BN_EPS = 1e-5


# -----------------------------------------------------------------------------
# Kernel
# -----------------------------------------------------------------------------
def classifier_kernel(x_ref, w1_ref, gamma_ref, beta_ref, w2_ref, b2_ref, out_ref):
    k = pl.program_id(0)

    # ---- Linear 1 on the MXU (bf16 in, f32 accumulate). b1 omitted: a
    # per-column constant is removed exactly by train-mode BN mean subtraction
    # and leaves the variance unchanged.
    # TODO(synk): if eval-mode BN (running_mean/running_var) is ever needed,
    # b1 must be re-added and the running stats streamed in instead.
    h = jnp.dot(x_ref[...], w1_ref[...], preferred_element_type=jnp.float32)  # [B, tH]

    # ---- BatchNorm1d training statistics in ONE sweep: E[h], E[h^2].
    # var = E[h^2] - E[h]^2 (f32 accumulation + eps makes cancellation benign).
    inv_b = 1.0 / h.shape[0]
    mean = jnp.sum(h, axis=0, keepdims=True) * inv_b          # [1, tH]
    mean_sq = jnp.sum(h * h, axis=0, keepdims=True) * inv_b   # [1, tH]
    var = jnp.maximum(mean_sq - mean * mean, 0.0)             # biased batch variance

    scale = gamma_ref[...] * lax.rsqrt(var + BN_EPS)          # rsqrt -> EUP slot
    shift = beta_ref[...] - mean * scale

    # ---- fused normalize + affine + ReLU: one FMA + one max over [B, tH] ----
    h_act = jnp.maximum(h * scale + shift, 0.0)

    # ---- Linear 2: accumulate this H-tile's contribution into the resident
    # output block (same output block index for every grid step). ----
    y_part = jnp.dot(h_act.astype(jnp.bfloat16), w2_ref[...],
                     preferred_element_type=jnp.float32)      # [B, Cp] f32

    @pl.when(k == 0)
    def _init():
        out_ref[...] = y_part + b2_ref[...]

    @pl.when(k > 0)
    def _accumulate():
        out_ref[...] = out_ref[...] + y_part


# -----------------------------------------------------------------------------
# Static sizing helpers
# -----------------------------------------------------------------------------
def _round_up(n, m):
    return ((n + m - 1) // m) * m


def _vmem_budget_bytes():
    """Generation-aware VMEM budget with headroom under the physical cap.

    v7x (64 MiB/TC) -> ~48 MiB; v5e/v6e (128 MiB) -> ~108 MiB.
    """
    try:
        cap = int(pltpu.get_tpu_info().vmem_capacity_bytes)
    except Exception:
        cap = 64 * 2**20  # conservative default (v7x per-TC size)
    return int(min(cap - (16 << 20), int(cap * 0.85)))


def _derive_h_tile(batch, dp, cp, hidden, budget, max_tile=2048):
    """Largest multiple-of-128 H tile that fits the VMEM budget, then shrunk to
    the minimum-padding tile achieving the same number of grid steps."""
    hp128 = _round_up(hidden, 128)
    # Resident blocks (counted with 2 buffers in case Buffered(1) is unavailable):
    # x [B,Dp] bf16, out [B,Cp] f32, b2 [1,Cp] f32.
    fixed = 2 * (batch * dp * 2) + 2 * (batch * cp * 4) + 2 * (cp * 4)
    # Per-unit-of-tH bytes: double-buffered W1/W2 bf16 tiles, gamma/beta f32
    # tiles, and ~4x [B,tH] f32-sized compute temporaries (h, h*h, h_act, cast).
    per = 2 * (dp * 2) + 2 * (cp * 2) + 2 * 2 * 4 + 4 * batch * 4
    avail = budget - fixed - (4 << 20)  # compiler-scratch headroom
    t_budget = (avail // per) // 128 * 128 if avail > 0 else 0
    t_max = max(128, min(max_tile, t_budget if t_budget > 0 else 128))
    n_steps = -(-hp128 // t_max)                       # ceil
    t_h = _round_up(-(-hp128 // n_steps), 128)         # minimal padding for n_steps
    return int(t_h)


def _spec(shape, index_map, buffers=None):
    """BlockSpec; optionally request a specific buffer count (single-buffer the
    resident blocks). Falls back silently on Pallas versions w/o pipeline_mode."""
    if buffers is not None:
        try:
            return pl.BlockSpec(shape, index_map, pipeline_mode=pl.Buffered(buffers))
        except TypeError:
            pass
    return pl.BlockSpec(shape, index_map)


# -----------------------------------------------------------------------------
# One-time weight preparation (hoisted off the per-call forward path)
# -----------------------------------------------------------------------------
def prepare_params(params, batch_size, max_tile=2048):
    """Cast/pad the weights once; returns padded device arrays + static tiling."""
    w1, gamma, beta, w2, b2 = (params["w1"], params["gamma"], params["beta"],
                               params["w2"], params["b2"])
    embed, hidden = w1.shape
    target = w2.shape[1]
    dp, cp = _round_up(embed, 128), _round_up(target, 128)

    budget = _vmem_budget_bytes()
    t_h = _derive_h_tile(batch_size, dp, cp, hidden, budget, max_tile=max_tile)
    hp = _round_up(hidden, t_h)  # pad H up to a multiple of the chosen tile

    # Padded hidden columns are inert: h == 0 there -> mean = var = 0,
    # shift = 0 -> ReLU output 0, and the zero-padded W2 rows contribute nothing.
    # TODO(synk): stream W1/W2 as int8 (v5e/v6e) / fp8 (v7x) with per-column
    # scales if model quality allows -- the kernel is weight-bandwidth bound.
    w1p = jnp.pad(w1.astype(jnp.bfloat16), ((0, dp - embed), (0, hp - hidden)))
    gp = jnp.pad(gamma.astype(jnp.float32), (0, hp - hidden),
                 constant_values=1.0).reshape(1, hp)
    bp = jnp.pad(beta.astype(jnp.float32), (0, hp - hidden)).reshape(1, hp)
    w2p = jnp.pad(w2.astype(jnp.bfloat16), ((0, hp - hidden), (0, cp - target)))
    b2p = jnp.pad(b2.astype(jnp.float32), (0, cp - target)).reshape(1, cp)

    return dict(w1p=w1p, gp=gp, bp=bp, w2p=w2p, b2p=b2p,
                tH=int(t_h), target_size=int(target), vmem_limit=int(budget))


# -----------------------------------------------------------------------------
# Forward
# -----------------------------------------------------------------------------
@functools.partial(jax.jit, static_argnames=("tH", "target_size", "vmem_limit"))
def _forward_padded(x, w1p, gp, bp, w2p, b2p, *, tH, target_size, vmem_limit):
    B, D = x.shape
    Dp, Hp = w1p.shape
    Cp = w2p.shape[1]
    grid = (Hp // tH,)

    # Only the activation is cast/padded per call; weights are pre-prepared.
    xp = jnp.pad(x.astype(jnp.bfloat16), ((0, 0), (0, Dp - D)))

    cost = pl.CostEstimate(
        flops=2 * B * (Dp * Hp + Hp * Cp),
        transcendentals=Hp,  # one rsqrt per hidden feature
        bytes_accessed=(B * Dp * 2 + Dp * Hp * 2 + Hp * Cp * 2
                        + B * Cp * 4 + 2 * Hp * 4 + Cp * 4),
    )

    out = pl.pallas_call(
        classifier_kernel,
        out_shape=jax.ShapeDtypeStruct((B, Cp), jnp.float32),
        grid_spec=pltpu.PrefetchScalarGridSpec(
            num_scalar_prefetch=0,
            grid=grid,
            in_specs=[
                _spec((B, Dp), lambda k: (0, 0), buffers=1),   # x: resident, 1 buffer
                _spec((Dp, tH), lambda k: (0, k)),             # W1 H-tile (2 buffers)
                _spec((1, tH), lambda k: (0, k)),              # gamma tile
                _spec((1, tH), lambda k: (0, k)),              # beta tile
                _spec((tH, Cp), lambda k: (k, 0)),             # W2 H-tile (2 buffers)
                _spec((1, Cp), lambda k: (0, 0), buffers=1),   # b2: resident, 1 buffer
            ],
            # Resident accumulator (same block index every step).
            out_specs=pl.BlockSpec((B, Cp), lambda k: (0, 0)),
        ),
        compiler_params=pltpu.CompilerParams(
            # H is a reduction axis (output block reused across every step).
            # TODO(synk): on v7x megacore, split the H reduction across the two
            # TensorCores (per-core partial [B,Cp] accumulators + barrier add).
            dimension_semantics=("arbitrary",),
            vmem_limit_bytes=vmem_limit,
        ),
        cost_estimate=cost,
    )(xp, w1p, gp, bp, w2p, b2p)

    return out[:, :target_size]


def classifier_forward(x, prepared):
    """x: [B, embed_dim] float32 -> [B, target_size] float32 logits."""
    return _forward_padded(
        x, prepared["w1p"], prepared["gp"], prepared["bp"],
        prepared["w2p"], prepared["b2p"],
        tH=prepared["tH"], target_size=prepared["target_size"],
        vmem_limit=prepared["vmem_limit"])


# -----------------------------------------------------------------------------
# Params + references
# -----------------------------------------------------------------------------
def init_params(key, embed_dim, hidden_dim, target_size):
    """PyTorch-default-style init. Linear weights stored pre-transposed [in, out]."""
    k1, k2, k3, k4 = jax.random.split(key, 4)
    bound1 = 1.0 / jnp.sqrt(embed_dim)
    bound2 = 1.0 / jnp.sqrt(hidden_dim)
    return dict(
        w1=jax.random.uniform(k1, (embed_dim, hidden_dim), jnp.float32, -bound1, bound1),
        b1=jax.random.uniform(k2, (hidden_dim,), jnp.float32, -bound1, bound1),
        gamma=jnp.ones((hidden_dim,), jnp.float32),
        beta=jnp.zeros((hidden_dim,), jnp.float32),
        w2=jax.random.uniform(k3, (hidden_dim, target_size), jnp.float32, -bound2, bound2),
        b2=jax.random.uniform(k4, (target_size,), jnp.float32, -bound2, bound2),
    )


def reference_forward_f32(x, params):
    """Pure-f32 reference with full PyTorch semantics (including the first bias)."""
    h = x @ params["w1"] + params["b1"]
    mean = jnp.mean(h, axis=0, keepdims=True)
    var = jnp.mean((h - mean) ** 2, axis=0, keepdims=True)
    h = (h - mean) * lax.rsqrt(var + BN_EPS)
    h = h * params["gamma"] + params["beta"]
    h = jnp.maximum(h, 0.0)
    return h @ params["w2"] + params["b2"]


def reference_forward_matched(x, params):
    """Reference mirroring the kernel numerics (bf16 MXU inputs, f32 stats, no b1)."""
    h = jnp.dot(x.astype(jnp.bfloat16), params["w1"].astype(jnp.bfloat16),
                preferred_element_type=jnp.float32)
    mean = jnp.mean(h, axis=0, keepdims=True)
    var = jnp.maximum(jnp.mean(h * h, axis=0, keepdims=True) - mean * mean, 0.0)
    scale = params["gamma"] * lax.rsqrt(var + BN_EPS)
    shift = params["beta"] - mean * scale
    h_act = jnp.maximum(h * scale + shift, 0.0)
    return jnp.dot(h_act.astype(jnp.bfloat16), params["w2"].astype(jnp.bfloat16),
                   preferred_element_type=jnp.float32) + params["b2"]


if __name__ == "__main__":
    # Small but TPU-friendly shapes: batch 128, embed 96 (zero-padded to 128),
    # hidden 512, target 10 (padded to 128 for lane-dense stores, sliced back).
    B, EMBED, HIDDEN, TARGET = 128, 96, 512, 10

    key = jax.random.PRNGKey(0)
    k_params, k_x = jax.random.split(key)
    params = init_params(k_params, EMBED, HIDDEN, TARGET)
    x = jax.random.normal(k_x, (B, EMBED), jnp.float32)

    ref_m = reference_forward_matched(x, params)
    ref_f32 = reference_forward_f32(x, params)

    # 1) Auto-sized H tile (collapses to a single grid step at these shapes).
    prepared = prepare_params(params, batch_size=B)
    logits = classifier_forward(x, prepared)
    jax.block_until_ready(logits)
    assert logits.shape == (B, TARGET)
    assert jnp.allclose(logits, ref_m, atol=1e-2, rtol=1e-2), (
        f"mismatch vs matched reference, max abs err "
        f"{jnp.max(jnp.abs(logits - ref_m)):.3e}")
    assert jnp.allclose(logits, ref_f32, atol=5e-2, rtol=5e-2), (
        f"mismatch vs f32 reference, max abs err "
        f"{jnp.max(jnp.abs(logits - ref_f32)):.3e}")

    # 2) Forced smaller tile -> exercises the multi-step H-reduction/accumulate path.
    prepared_small = prepare_params(params, batch_size=B, max_tile=256)
    assert prepared_small["tH"] == 256
    logits2 = classifier_forward(x, prepared_small)
    jax.block_until_ready(logits2)
    assert jnp.allclose(logits2, ref_m, atol=1e-2, rtol=1e-2), (
        f"multi-tile mismatch vs matched reference, max abs err "
        f"{jnp.max(jnp.abs(logits2 - ref_m)):.3e}")

    print("KERNEL_OK")
</pallas_src>

<mosaic_0001>
module attributes {stable_mosaic.version = 11 : i64} {
  func.func @classifier_kernel(%arg0: i32, %arg1: memref<128x128xbf16, #tpu.memory_space<vmem>>, %arg2: memref<128x512xbf16, #tpu.memory_space<vmem>>, %arg3: memref<1x512xf32, #tpu.memory_space<vmem>>, %arg4: memref<1x512xf32, #tpu.memory_space<vmem>>, %arg5: memref<512x128xbf16, #tpu.memory_space<vmem>>, %arg6: memref<1x128xf32, #tpu.memory_space<vmem>>, %arg7: memref<128x128xf32, #tpu.memory_space<vmem>>) attributes {dimension_semantics = [#tpu.dimension_semantics<arbitrary>], iteration_bounds = array<i64: 1>, scalar_prefetch = 0 : i64, scratch_operands = 0 : i64, tpu.core_type = #tpu.core_type<tc>, window_params = [{pipeline_mode = #tpu.pipeline_mode<synchronous>, transform_indices = @transform_0, window_bounds = array<i64: 128, 128>}, {transform_indices = @transform_1, window_bounds = array<i64: 128, 512>}, {transform_indices = @transform_2, window_bounds = array<i64: 1, 512>}, {transform_indices = @transform_3, window_bounds = array<i64: 1, 512>}, {transform_indices = @transform_4, window_bounds = array<i64: 512, 128>}, {pipeline_mode = #tpu.pipeline_mode<synchronous>, transform_indices = @transform_5, window_bounds = array<i64: 1, 128>}, {pipeline_mode = #tpu.pipeline_mode<synchronous>, transform_indices = @transform_6, window_bounds = array<i64: 128, 128>}]} {
    %c0 = arith.constant 0 : index
    %c0_0 = arith.constant 0 : index
    %0 = vector.load %arg1[%c0, %c0_0] : memref<128x128xbf16, #tpu.memory_space<vmem>>, vector<128x128xbf16>
    %c0_1 = arith.constant 0 : index
    %c0_2 = arith.constant 0 : index
    %1 = vector.load %arg2[%c0_1, %c0_2] : memref<128x512xbf16, #tpu.memory_space<vmem>>, vector<128x512xbf16>
    %cst = arith.constant dense<0.000000e+00> : vector<128x512xf32>
    %2 = tpu.matmul %0, %1, %cst {dimension_numbers = #tpu.dot_dimension_numbers<[1], [0], [0], [1], [0, 0, 1, 1], [], []>} : vector<128x128xbf16>, vector<128x512xbf16>, vector<128x512xf32> -> vector<128x512xf32>
    %cst_3 = arith.constant dense<0.000000e+00> : vector<512xf32>
    %3 = vector.multi_reduction <add>, %2, %cst_3 [0] : vector<128x512xf32> to vector<512xf32>
    %4 = vector.shape_cast %3 : vector<512xf32> to vector<1x512xf32>
    %cst_4 = arith.constant 7.812500e-03 : f32
    %5 = vector.broadcast %cst_4 : f32 to vector<1x512xf32>
    %6 = arith.mulf %4, %5 : vector<1x512xf32>
    %7 = arith.mulf %2, %2 : vector<128x512xf32>
    %cst_5 = arith.constant dense<0.000000e+00> : vector<512xf32>
    %8 = vector.multi_reduction <add>, %7, %cst_5 [0] : vector<128x512xf32> to vector<512xf32>
    %9 = vector.shape_cast %8 : vector<512xf32> to vector<1x512xf32>
    %cst_6 = arith.constant 7.812500e-03 : f32
    %10 = vector.broadcast %cst_6 : f32 to vector<1x512xf32>
    %11 = arith.mulf %9, %10 : vector<1x512xf32>
    %12 = arith.mulf %6, %6 : vector<1x512xf32>
    %13 = arith.subf %11, %12 : vector<1x512xf32>
    %cst_7 = arith.constant 0.000000e+00 : f32
    %14 = vector.broadcast %cst_7 : f32 to vector<1x512xf32>
    %15 = arith.maximumf %13, %14 : vector<1x512xf32>
    %c0_8 = arith.constant 0 : index
    %c0_9 = arith.constant 0 : index
    %16 = vector.load %arg3[%c0_8, %c0_9] : memref<1x512xf32, #tpu.memory_space<vmem>>, vector<1x512xf32>
    %cst_10 = arith.constant 9.99999974E-6 : f32
    %17 = vector.broadcast %cst_10 : f32 to vector<1x512xf32>
    %18 = arith.addf %15, %17 : vector<1x512xf32>
    %19 = math.rsqrt %18 : vector<1x512xf32>
    %20 = arith.mulf %16, %19 : vector<1x512xf32>
    %c0_11 = arith.constant 0 : index
    %c0_12 = arith.constant 0 : index
    %21 = vector.load %arg4[%c0_11, %c0_12] : memref<1x512xf32, #tpu.memory_space<vmem>>, vector<1x512xf32>
    %22 = arith.mulf %6, %20 : vector<1x512xf32>
    %23 = arith.subf %21, %22 : vector<1x512xf32>
    %24 = vector.broadcast %20 : vector<1x512xf32> to vector<128x512xf32>
    %25 = arith.mulf %2, %24 : vector<128x512xf32>
    %26 = vector.broadcast %23 : vector<1x512xf32> to vector<128x512xf32>
    %27 = arith.addf %25, %26 : vector<128x512xf32>
    %cst_13 = arith.constant 0.000000e+00 : f32
    %28 = vector.broadcast %cst_13 : f32 to vector<128x512xf32>
    %29 = arith.maximumf %27, %28 : vector<128x512xf32>
    %30 = arith.truncf %29 : vector<128x512xf32> to vector<128x512xbf16>
    %c0_14 = arith.constant 0 : index
    %c0_15 = arith.constant 0 : index
    %31 = vector.load %arg5[%c0_14, %c0_15] : memref<512x128xbf16, #tpu.memory_space<vmem>>, vector<512x128xbf16>
    %cst_16 = arith.constant dense<0.000000e+00> : vector<128x128xf32>
    %32 = tpu.matmul %30, %31, %cst_16 {dimension_numbers = #tpu.dot_dimension_numbers<[1], [0], [0], [1], [0, 0, 1, 1], [], []>} : vector<128x512xbf16>, vector<512x128xbf16>, vector<128x128xf32> -> vector<128x128xf32>
    %c0_i32 = arith.constant 0 : i32
    %33 = arith.cmpi eq, %arg0, %c0_i32 : i32
    %34 = arith.extui %33 : i1 to i32
    %c0_i32_17 = arith.constant 0 : i32
    %35 = arith.cmpi ne, %34, %c0_i32_17 : i32
    scf.if %35 {
      %c0_20 = arith.constant 0 : index
      %c0_21 = arith.constant 0 : index
      %39 = vector.load %arg6[%c0_20, %c0_21] : memref<1x128xf32, #tpu.memory_space<vmem>>, vector<1x128xf32>
      %40 = vector.broadcast %39 : vector<1x128xf32> to vector<128x128xf32>
      %41 = arith.addf %32, %40 : vector<128x128xf32>
      %c0_22 = arith.constant 0 : index
      %c0_23 = arith.constant 0 : index
      %42 = vector.load %arg7[%c0_22, %c0_23] : memref<128x128xf32, #tpu.memory_space<vmem>>, vector<128x128xf32>
      tpu.vector_store %arg7[%c0_22, %c0_23], %41 {strides = array<i32>} : memref<128x128xf32, #tpu.memory_space<vmem>>, vector<128x128xf32>,
    } else {
    }
    %c0_i32_18 = arith.constant 0 : i32
    %36 = arith.cmpi sgt, %arg0, %c0_i32_18 : i32
    %37 = arith.extui %36 : i1 to i32
    %c0_i32_19 = arith.constant 0 : i32
    %38 = arith.cmpi ne, %37, %c0_i32_19 : i32
    scf.if %38 {
      %c0_20 = arith.constant 0 : index
      %c0_21 = arith.constant 0 : index
      %39 = vector.load %arg7[%c0_20, %c0_21] : memref<128x128xf32, #tpu.memory_space<vmem>>, vector<128x128xf32>
      %40 = arith.addf %39, %32 : vector<128x128xf32>
      %c0_22 = arith.constant 0 : index
      %c0_23 = arith.constant 0 : index
      %41 = vector.load %arg7[%c0_22, %c0_23] : memref<128x128xf32, #tpu.memory_space<vmem>>, vector<128x128xf32>
      tpu.vector_store %arg7[%c0_22, %c0_23], %40 {strides = array<i32>} : memref<128x128xf32, #tpu.memory_space<vmem>>, vector<128x128xf32>,
    } else {
    }
    return
  }
  func.func @transform_0(%arg0: i32) -> (i32, i32) {
    %c0_i32 = arith.constant 0 : i32
    %c0_i32_0 = arith.constant 0 : i32
    %c0_i32_1 = arith.constant 0 : i32
    return %c0_i32, %c0_i32_0 : i32, i32
  }
  func.func @transform_1(%arg0: i32) -> (i32, i32) {
    %c0_i32 = arith.constant 0 : i32
    %c0_i32_0 = arith.constant 0 : i32
    return %c0_i32, %arg0 : i32, i32
  }
  func.func @transform_2(%arg0: i32) -> (i32, i32) {
    %c0_i32 = arith.constant 0 : i32
    %c0_i32_0 = arith.constant 0 : i32
    return %c0_i32, %arg0 : i32, i32
  }
  func.func @transform_3(%arg0: i32) -> (i32, i32) {
    %c0_i32 = arith.constant 0 : i32
    %c0_i32_0 = arith.constant 0 : i32
    return %c0_i32, %arg0 : i32, i32
  }
  func.func @transform_4(%arg0: i32) -> (i32, i32) {
    %c0_i32 = arith.constant 0 : i32
    %c0_i32_0 = arith.constant 0 : i32
    return %arg0, %c0_i32 : i32, i32
  }
  func.func @transform_5(%arg0: i32) -> (i32, i32) {
    %c0_i32 = arith.constant 0 : i32
    %c0_i32_0 = arith.constant 0 : i32
    %c0_i32_1 = arith.constant 0 : i32
    return %c0_i32, %c0_i32_0 : i32, i32
  }
  func.func @transform_6(%arg0: i32) -> (i32, i32) {
    %c0_i32 = arith.constant 0 : i32
    %c0_i32_0 = arith.constant 0 : i32
    %c0_i32_1 = arith.constant 0 : i32
    return %c0_i32, %c0_i32_0 : i32, i32
  }
}

</mosaic_0001>

<llo_original>
// kernel: _forward_padded.1
$region0: #{_forward_padded.1}
  #allocation0 [shape = 'u32[]', space=smem, size = 0x4, offset = 0x4, fixed_abs, tag = 'smem constant byte address 0x4 - core index']
  #allocation1 [shape = 'u32[144,128]{1,0:T(1,128)}', space=vmem, size = 0x12000, scoped, tag = 'internal scratch']
  %s0 = inlined_call_operand.vmem [shape: bf16[128,128], index: 0, kind: input, shape index: {}]
  %s1 = inlined_call_operand.vmem [shape: bf16[128,512], index: 1, kind: input, shape index: {}]
  %s2 = inlined_call_operand.vmem [shape: f32[1,512], index: 2, kind: input, shape index: {}]
  %s3 = inlined_call_operand.vmem [shape: f32[1,512], index: 3, kind: input, shape index: {}]
  %s4 = inlined_call_operand.hbm [shape: bf16[512,128], index: 4, kind: input, shape index: {}]
  %s5 = inlined_call_operand.vmem [shape: f32[1,128], index: 5, kind: input, shape index: {}]
  %s6 = inlined_call_operand.vmem [shape: f32[128,128], index: 6, kind: output, shape index: {}]
  %s7 = sld [smem:[#allocation0]]
  $region46: #{_forward_padded.1} parent=0
    _
  %s9 = ssub.s32 1, %s7
  %s10 = scalar_select 0, %s9, %s7
  $region1: #{_forward_padded.1} parent=0
    #allocation2 [shape = 'u8[131072]{0}', space=vmem, size = 0x20000, scoped, tag = 'input window, operand 4, single buffered']
    #allocation3 [shape = 's32[1]{0}', space=sflag, size = 0x4, scoped, tag = 'scoped memory for _forward_padded.1']
    %11 = vsyncpa [#allocation3], 0
    // Predicated region
    $region2: #{_forward_padded.1} parent=1 // pred_check
      _
    $region3: #{_forward_padded.1} parent=1 // pred_check_branch
      %13 = sbr.rel (0) target = $region5
    $region4: #{_forward_padded.1} parent=1 // pred_region
      _
    $region5: #{_forward_padded.1} parent=1 // pred_fallthru
      _
    // Predicated region
    $region6: #{_forward_padded.1} parent=1 // pred_check
      _
    $region7: #{_forward_padded.1} parent=1 // pred_check_branch
      %15 = sbr.rel (0) target = $region9
    $region8: #{_forward_padded.1} parent=1 // pred_region
      _
    $region9: #{_forward_padded.1} parent=1 // pred_fallthru
      _
    // Predicated region
    $region10: #{_forward_padded.1} parent=1 // pred_check
      _
    $region11: #{_forward_padded.1} parent=1 // pred_check_branch
      %17 = sbr.rel (0) target = $region13
    $region12: #{_forward_padded.1} parent=1 // pred_region
      _
    $region13: #{_forward_padded.1} parent=1 // pred_fallthru
      _
    // Predicated region
    $region14: #{_forward_padded.1} parent=1 // pred_check
      _
    $region15: #{_forward_padded.1} parent=1 // pred_check_branch
      %19 = sbr.rel (0) target = $region17
    $region16: #{_forward_padded.1} parent=1 // pred_region
      _
    $region17: #{_forward_padded.1} parent=1 // pred_fallthru
      _
    // Predicated region
    $region18: #{_forward_padded.1} parent=1 // pred_check
      _
    $region19: #{_forward_padded.1} parent=1 // pred_check_branch
      %21 = sbr.rel (0) target = $region21
    $region20: #{_forward_padded.1} parent=1 // pred_region
      %s23 = ssub.s32 4096, 4096
      %24 = vsyncadd [#allocation3], %s23
      %s25 = sshll.u32 [#allocation2], 4
      %s26 = int_to_ptr.vmem [resolvable:$true] %s25
      %31 = dma.hbm_to_vmem [thread:$0]  %s4, 4096, %s26, [#allocation3], 64, 64, 4
    $region21: #{_forward_padded.1} parent=1 // pred_fallthru
      _
    // Predicated region
    $region22: #{_forward_padded.1} parent=1 // pred_check
      _
    $region23: #{_forward_padded.1} parent=1 // pred_check_branch
      %33 = sbr.rel (0) target = $region25
    $region24: #{_forward_padded.1} parent=1 // pred_region
      _
    $region25: #{_forward_padded.1} parent=1 // pred_fallthru
      _
    // Predicated region
    $region26: #{_forward_padded.1} parent=1 // pred_check
      _
    $region27: #{_forward_padded.1} parent=1 // pred_check_branch
      %35 = sbr.rel (0) target = $region29
    $region28: #{_forward_padded.1} parent=1 // pred_region
      %36 = dma.done [#allocation3], 4096
    $region29: #{_forward_padded.1} parent=1 // pred_fallthru
      _
    %v38 = vld [vmem:[%s0] sm:$0xf]
    %v39 = vld [vmem:[%s0 + $0x4] sm:$0xf]
    %v40 = vld [vmem:[%s0 + $0x8] sm:$0xf]
    %v41 = vld [vmem:[%s0 + $0xc] sm:$0xf]
    %v42 = vld [vmem:[%s0 + $0x10] sm:$0xf]
    %v43 = vld [vmem:[%s0 + $0x14] sm:$0xf]
    %v44 = vld [vmem:[%s0 + $0x18] sm:$0xf]
    %v45 = vld [vmem:[%s0 + $0x1c] sm:$0xf]
    %v46 = vld [vmem:[%s0 + $0x20] sm:$0xf]
    %v47 = vld [vmem:[%s0 + $0x24] sm:$0xf]
    %v48 = vld [vmem:[%s0 + $0x28] sm:$0xf]
    %v49 = vld [vmem:[%s0 + $0x2c] sm:$0xf]
    %v50 = vld [vmem:[%s0 + $0x30] sm:$0xf]
    %v51 = vld [vmem:[%s0 + $0x34] sm:$0xf]
    %v52 = vld [vmem:[%s0 + $0x38] sm:$0xf]
    %v53 = vld [vmem:[%s0 + $0x3c] sm:$0xf]
    %v54 = vld [vmem:[%s1] sm:$0xff]
    %v55 = vld [vmem:[%s1 + $0x8] sm:$0xff]
    %v56 = vld [vmem:[%s1 + $0x10] sm:$0xff]
    %v57 = vld [vmem:[%s1 + $0x18] sm:$0xff]
    %v58 = vld [vmem:[%s1 + $0x20] sm:$0xff]
    %v59 = vld [vmem:[%s1 + $0x28] sm:$0xff]
    %v60 = vld [vmem:[%s1 + $0x30] sm:$0xff]
    %v61 = vld [vmem:[%s1 + $0x38] sm:$0xff]
    %v62 = vld [vmem:[%s1 + $0x40] sm:$0xff]
    %v63 = vld [vmem:[%s1 + $0x48] sm:$0xff]
    %v64 = vld [vmem:[%s1 + $0x50] sm:$0xff]
    %v65 = vld [vmem:[%s1 + $0x58] sm:$0xff]
    %v66 = vld [vmem:[%s1 + $0x60] sm:$0xff]
    %v67 = vld [vmem:[%s1 + $0x68] sm:$0xff]
    %v68 = vld [vmem:[%s1 + $0x70] sm:$0xff]
    %v69 = vld [vmem:[%s1 + $0x78] sm:$0xff]
    %v70 = vld [vmem:[%s1 + $0x80] sm:$0xff]
    %v71 = vld [vmem:[%s1 + $0x88] sm:$0xff]
    %v72 = vld [vmem:[%s1 + $0x90] sm:$0xff]
    %v73 = vld [vmem:[%s1 + $0x98] sm:$0xff]
    %v74 = vld [vmem:[%s1 + $0xa0] sm:$0xff]
    %v75 = vld [vmem:[%s1 + $0xa8] sm:$0xff]
    %v76 = vld [vmem:[%s1 + $0xb0] sm:$0xff]
    %v77 = vld [vmem:[%s1 + $0xb8] sm:$0xff]
    %v78 = vld [vmem:[%s1 + $0xc0] sm:$0xff]
    %v79 = vld [vmem:[%s1 + $0xc8] sm:$0xff]
    %v80 = vld [vmem:[%s1 + $0xd0] sm:$0xff]
    %v81 = vld [vmem:[%s1 + $0xd8] sm:$0xff]
    %v82 = vld [vmem:[%s1 + $0xe0] sm:$0xff]
    %v83 = vld [vmem:[%s1 + $0xe8] sm:$0xff]
    %v84 = vld [vmem:[%s1 + $0xf0] sm:$0xff]
    %v85 = vld [vmem:[%s1 + $0xf8] sm:$0xff]
    %v102 = vunpack.c.l.b16 %v38
    %v103 = vunpack.c.l.b16 %v39
    %v104 = vunpack.c.l.b16 %v40
    %v105 = vunpack.c.l.b16 %v41
    %v106 = vunpack.c.l.b16 %v42
    %v107 = vunpack.c.l.b16 %v43
    %v108 = vunpack.c.l.b16 %v44
    %v109 = vunpack.c.l.b16 %v45
    %v110 = vunpack.c.l.b16 %v46
    %v111 = vunpack.c.l.b16 %v47
    %v112 = vunpack.c.l.b16 %v48
    %v113 = vunpack.c.l.b16 %v49
    %v114 = vunpack.c.l.b16 %v50
    %v115 = vunpack.c.l.b16 %v51
    %v116 = vunpack.c.l.b16 %v52
    %v117 = vunpack.c.l.b16 %v53
    %v118 = vpack.c.b16 %v103, %v102
    %v119 = vpack.c.b16 %v105, %v104
    %v120 = vpack.c.b16 %v107, %v106
    %v121 = vpack.c.b16 %v109, %v108
    %v122 = vpack.c.b16 %v111, %v110
    %v123 = vpack.c.b16 %v113, %v112
    %v124 = vpack.c.b16 %v115, %v114
    %v125 = vpack.c.b16 %v117, %v116
    %v166 = vunpack.c.l.b16 %v54
    %v167 = vunpack.c.h.b16 %v54
    %v168 = vunpack.c.l.b16 %v55
    %v169 = vunpack.c.h.b16 %v55
    %v170 = vunpack.c.l.b16 %v56
    %v171 = vunpack.c.h.b16 %v56
    %v172 = vunpack.c.l.b16 %v57
    %v173 = vunpack.c.h.b16 %v57
    %v174 = vunpack.c.l.b16 %v58
    %v175 = vunpack.c.h.b16 %v58
    %v176 = vunpack.c.l.b16 %v59
    %v177 = vunpack.c.h.b16 %v59
    %v178 = vunpack.c.l.b16 %v60
    %v179 = vunpack.c.h.b16 %v60
    %v180 = vunpack.c.l.b16 %v61
    %v181 = vunpack.c.h.b16 %v61
    %v182 = vunpack.c.l.b16 %v62
    %v183 = vunpack.c.h.b16 %v62
    %v184 = vunpack.c.l.b16 %v63
    %v185 = vunpack.c.h.b16 %v63
    %v186 = vunpack.c.l.b16 %v64
    %v187 = vunpack.c.h.b16 %v64
    %v188 = vunpack.c.l.b16 %v65
    %v189 = vunpack.c.h.b16 %v65
    %v190 = vunpack.c.l.b16 %v66
    %v191 = vunpack.c.h.b16 %v66
    %v192 = vunpack.c.l.b16 %v67
    %v193 = vunpack.c.h.b16 %v67
    %v194 = vunpack.c.l.b16 %v68
    %v195 = vunpack.c.h.b16 %v68
    %v196 = vunpack.c.l.b16 %v69
    %v197 = vunpack.c.h.b16 %v69
    %v198 = vunpack.c.l.b16 %v70
    %v199 = vunpack.c.h.b16 %v70
    %v200 = vunpack.c.l.b16 %v71
    %v201 = vunpack.c.h.b16 %v71
    %v202 = vunpack.c.l.b16 %v72
    %v203 = vunpack.c.h.b16 %v72
    %v204 = vunpack.c.l.b16 %v73
    %v205 = vunpack.c.h.b16 %v73
    %v206 = vunpack.c.l.b16 %v74
    %v207 = vunpack.c.h.b16 %v74
    %v208 = vunpack.c.l.b16 %v75
    %v209 = vunpack.c.h.b16 %v75
    %v210 = vunpack.c.l.b16 %v76
    %v211 = vunpack.c.h.b16 %v76
    %v212 = vunpack.c.l.b16 %v77
    %v213 = vunpack.c.h.b16 %v77
    %v214 = vunpack.c.l.b16 %v78
    %v215 = vunpack.c.h.b16 %v78
    %v216 = vunpack.c.l.b16 %v79
    %v217 = vunpack.c.h.b16 %v79
    %v218 = vunpack.c.l.b16 %v80
    %v219 = vunpack.c.h.b16 %v80
    %v220 = vunpack.c.l.b16 %v81
    %v221 = vunpack.c.h.b16 %v81
    %v222 = vunpack.c.l.b16 %v82
    %v223 = vunpack.c.h.b16 %v82
    %v224 = vunpack.c.l.b16 %v83
    %v225 = vunpack.c.h.b16 %v83
    %v226 = vunpack.c.l.b16 %v84
    %v227 = vunpack.c.h.b16 %v84
    %v228 = vunpack.c.l.b16 %v85
    %v229 = vunpack.c.h.b16 %v85
    %v230 = vpack.c.b16 %v170, %v166
    %v231 = vpack.c.b16 %v171, %v167
    %v232 = vpack.c.b16 %v172, %v168
    %v233 = vpack.c.b16 %v173, %v169
    %v234 = vpack.c.b16 %v178, %v174
    %v235 = vpack.c.b16 %v179, %v175
    %v236 = vpack.c.b16 %v180, %v176
    %v237 = vpack.c.b16 %v181, %v177
    %v238 = vpack.c.b16 %v186, %v182
    %v239 = vpack.c.b16 %v187, %v183
    %v240 = vpack.c.b16 %v188, %v184
    %v241 = vpack.c.b16 %v189, %v185
    %v242 = vpack.c.b16 %v194, %v190
    %v243 = vpack.c.b16 %v195, %v191
    %v244 = vpack.c.b16 %v196, %v192
    %v245 = vpack.c.b16 %v197, %v193
    %v246 = vpack.c.b16 %v202, %v198
    %v247 = vpack.c.b16 %v203, %v199
    %v248 = vpack.c.b16 %v204, %v200
    %v249 = vpack.c.b16 %v205, %v201
    %v250 = vpack.c.b16 %v210, %v206
    %v251 = vpack.c.b16 %v211, %v207
    %v252 = vpack.c.b16 %v212, %v208
    %v253 = vpack.c.b16 %v213, %v209
    %v254 = vpack.c.b16 %v218, %v214
    %v255 = vpack.c.b16 %v219, %v215
    %v256 = vpack.c.b16 %v220, %v216
    %v257 = vpack.c.b16 %v221, %v217
    %v258 = vpack.c.b16 %v226, %v222
    %v259 = vpack.c.b16 %v227, %v223
    %v260 = vpack.c.b16 %v228, %v224
    %v261 = vpack.c.b16 %v229, %v225
    %294 = vmatprep.subr.bf16.mxu0 %v259
    %295 = vmatpush1.bf16.msra.mxu0 %v258
    %296 = vmatprep.subr.bf16.mxu0 %v255
    %297 = vmatpush1.bf16.msra.mxu0 %v254
    %298 = vmatprep.subr.bf16.mxu0 %v251
    %299 = vmatpush1.bf16.msra.mxu0 %v250
    %300 = vmatprep.subr.bf16.mxu0 %v247
    %301 = vmatpush1.bf16.msra.mxu0 %v246
    %302 = vmatprep.subr.bf16.mxu0 %v243
    %303 = vmatpush1.bf16.msra.mxu0 %v242
    %304 = vmatprep.subr.bf16.mxu0 %v239
    %305 = vmatpush1.bf16.msra.mxu0 %v238
    %306 = vmatprep.subr.bf16.mxu0 %v235
    %307 = vmatpush1.bf16.msra.mxu0 %v234
    %308 = vmatprep.subr.bf16.mxu0 %v231
    %309 = vmatpush1.bf16.msra.mxu0 %v230
    %310 = vmatprep.subr.bf16.mxu0 0
    %311 = vmatpush2.bf16.msra.mxu0 0
    %312 = vmatprep.subr.bf16.mxu0 0
    %313 = vmatpush2.bf16.msra.mxu0 0
    %314 = vmatprep.subr.bf16.mxu0 0
    %315 = vmatpush2.bf16.msra.mxu0 0
    %316 = vmatprep.subr.bf16.mxu0 0
    %317 = vmatpush2.bf16.msra.mxu0 0
    %318 = vmatprep.subr.bf16.mxu0 0
    %319 = vmatpush2.bf16.msra.mxu0 0
    %320 = vmatprep.subr.bf16.mxu0 0
    %321 = vmatpush2.bf16.msra.mxu0 0
    %322 = vmatprep.subr.bf16.mxu0 0
    %323 = vmatpush2.bf16.msra.mxu0 0
    %324 = vmatprep.subr.bf16.mxu0 0
    %325 = vmatpush2.bf16.msra.mxu0 0
    %326 = vmatprep.mubr.bf16.mxu0 0
    %327 = vmatmul.mubr.bf16.gmra.mxu0 %v118
    %v328 = vpop.f32.mrf.mxu0
    %v329 = vadd.f32 0.0, %v328
    %v330 = vpop.f32.mrf.mxu0
    %v331 = vadd.f32 0.0, %v330
    %v332 = vpop.f32.mrf.mxu0
    %v333 = vadd.f32 0.0, %v332
    %v334 = vpop.f32.mrf.mxu0
    %v335 = vadd.f32 0.0, %v334
    %336 = vmatprep.mubr.bf16.mxu0 0
    %337 = vmatmul.mubr.bf16.gmra.mxu0 %v119
    %v338 = vpop.f32.mrf.mxu0
    %v339 = vadd.f32 0.0, %v338
    %v340 = vpop.f32.mrf.mxu0
    %v341 = vadd.f32 0.0, %v340
    %v342 = vpop.f32.mrf.mxu0
    %v343 = vadd.f32 0.0, %v342
    %v344 = vpop.f32.mrf.mxu0
    %v345 = vadd.f32 0.0, %v344
    %346 = vmatprep.mubr.bf16.mxu0 0
    %347 = vmatmul.mubr.bf16.gmra.mxu0 %v120
    %v348 = vpop.f32.mrf.mxu0
    %v349 = vadd.f32 0.0, %v348
    %v350 = vpop.f32.mrf.mxu0
    %v351 = vadd.f32 0.0, %v350
    %v352 = vpop.f32.mrf.mxu0
    %v353 = vadd.f32 0.0, %v352
    %v354 = vpop.f32.mrf.mxu0
    %v355 = vadd.f32 0.0, %v354
    %356 = vmatprep.mubr.bf16.mxu0 0
    %357 = vmatmul.mubr.bf16.gmra.mxu0 %v121
    %v358 = vpop.f32.mrf.mxu0
    %v359 = vadd.f32 0.0, %v358
    %v360 = vpop.f32.mrf.mxu0
    %v361 = vadd.f32 0.0, %v360
    %v362 = vpop.f32.mrf.mxu0
    %v363 = vadd.f32 0.0, %v362
    %v364 = vpop.f32.mrf.mxu0
    %v365 = vadd.f32 0.0, %v364
    %366 = vmatprep.mubr.bf16.mxu0 0
    %367 = vmatmul.mubr.bf16.gmra.mxu0 %v122
    %v368 = vpop.f32.mrf.mxu0
    %v369 = vadd.f32 0.0, %v368
    %v370 = vpop.f32.mrf.mxu0
    %v371 = vadd.f32 0.0, %v370
    %v372 = vpop.f32.mrf.mxu0
    %v373 = vadd.f32 0.0, %v372
    %v374 = vpop.f32.mrf.mxu0
    %v375 = vadd.f32 0.0, %v374
    %376 = vmatprep.mubr.bf16.mxu0 0
    %377 = vmatmul.mubr.bf16.gmra.mxu0 %v123
    %v378 = vpop.f32.mrf.mxu0
    %v379 = vadd.f32 0.0, %v378
    %v380 = vpop.f32.mrf.mxu0
    %v381 = vadd.f32 0.0, %v380
    %v382 = vpop.f32.mrf.mxu0
    %v383 = vadd.f32 0.0, %v382
    %v384 = vpop.f32.mrf.mxu0
    %v385 = vadd.f32 0.0, %v384
    %386 = vmatprep.mubr.bf16.mxu0 0
    %387 = vmatmul.mubr.bf16.gmra.mxu0 %v124
    %v388 = vpop.f32.mrf.mxu0
    %v389 = vadd.f32 0.0, %v388
    %v390 = vpop.f32.mrf.mxu0
    %v391 = vadd.f32 0.0, %v390
    %v392 = vpop.f32.mrf.mxu0
    %v393 = vadd.f32 0.0, %v392
    %v394 = vpop.f32.mrf.mxu0
    %v395 = vadd.f32 0.0, %v394
    %396 = vmatprep.mubr.bf16.mxu0 0
    %397 = vmatmul.mubr.bf16.gmra.mxu0 %v125
    %v398 = vpop.f32.mrf.mxu0
    %v399 = vadd.f32 0.0, %v398
    %v400 = vpop.f32.mrf.mxu0
    %v401 = vadd.f32 0.0, %v400
    %v402 = vpop.f32.mrf.mxu0
    %v403 = vadd.f32 0.0, %v402
    %v404 = vpop.f32.mrf.mxu0
    %v405 = vadd.f32 0.0, %v404
    %406 = vdwg.mxu0
    %407 = vmatprep.subr.bf16.mxu0 %v261
    %408 = vmatpush1.bf16.msra.mxu0 %v260
    %409 = vmatprep.subr.bf16.mxu0 %v257
    %410 = vmatpush1.bf16.msra.mxu0 %v256
    %411 = vmatprep.subr.bf16.mxu0 %v253
    %412 = vmatpush1.bf16.msra.mxu0 %v252
    %413 = vmatprep.subr.bf16.mxu0 %v249
    %414 = vmatpush1.bf16.msra.mxu0 %v248
    %415 = vmatprep.subr.bf16.mxu0 %v245
    %416 = vmatpush1.bf16.msra.mxu0 %v244
    %417 = vmatprep.subr.bf16.mxu0 %v241
    %418 = vmatpush1.bf16.msra.mxu0 %v240
    %419 = vmatprep.subr.bf16.mxu0 %v237
    %420 = vmatpush1.bf16.msra.mxu0 %v236
    %421 = vmatprep.subr.bf16.mxu0 %v233
    %422 = vmatpush1.bf16.msra.mxu0 %v232
    %423 = vmatprep.subr.bf16.mxu0 0
    %424 = vmatpush2.bf16.msra.mxu0 0
    %425 = vmatprep.subr.bf16.mxu0 0
    %426 = vmatpush2.bf16.msra.mxu0 0
    %427 = vmatprep.subr.bf16.mxu0 0
    %428 = vmatpush2.bf16.msra.mxu0 0
    %429 = vmatprep.subr.bf16.mxu0 0
    %430 = vmatpush2.bf16.msra.mxu0 0
    %431 = vmatprep.subr.bf16.mxu0 0
    %432 = vmatpush2.bf16.msra.mxu0 0
    %433 = vmatprep.subr.bf16.mxu0 0
    %434 = vmatpush2.bf16.msra.mxu0 0
    %435 = vmatprep.subr.bf16.mxu0 0
    %436 = vmatpush2.bf16.msra.mxu0 0
    %437 = vmatprep.subr.bf16.mxu0 0
    %438 = vmatpush2.bf16.msra.mxu0 0
    %439 = vmatprep.mubr.bf16.mxu0 0
    %440 = vmatmul.mubr.bf16.gmra.mxu0 %v118
    %v441 = vpop.f32.mrf.mxu0
    %v442 = vadd.f32 0.0, %v441
    %v443 = vpop.f32.mrf.mxu0
    %v444 = vadd.f32 0.0, %v443
    %v445 = vpop.f32.mrf.mxu0
    %v446 = vadd.f32 0.0, %v445
    %v447 = vpop.f32.mrf.mxu0
    %v448 = vadd.f32 0.0, %v447
    %449 = vmatprep.mubr.bf16.mxu0 0
    %450 = vmatmul.mubr.bf16.gmra.mxu0 %v119
    %v451 = vpop.f32.mrf.mxu0
    %v452 = vadd.f32 0.0, %v451
    %v453 = vpop.f32.mrf.mxu0
    %v454 = vadd.f32 0.0, %v453
    %v455 = vpop.f32.mrf.mxu0
    %v456 = vadd.f32 0.0, %v455
    %v457 = vpop.f32.mrf.mxu0
    %v458 = vadd.f32 0.0, %v457
    %459 = vmatprep.mubr.bf16.mxu0 0
    %460 = vmatmul.mubr.bf16.gmra.mxu0 %v120
    %v461 = vpop.f32.mrf.mxu0
    %v462 = vadd.f32 0.0, %v461
    %v463 = vpop.f32.mrf.mxu0
    %v464 = vadd.f32 0.0, %v463
    %v465 = vpop.f32.mrf.mxu0
    %v466 = vadd.f32 0.0, %v465
    %v467 = vpop.f32.mrf.mxu0
    %v468 = vadd.f32 0.0, %v467
    %469 = vmatprep.mubr.bf16.mxu0 0
    %470 = vmatmul.mubr.bf16.gmra.mxu0 %v121
    %v471 = vpop.f32.mrf.mxu0
    %v472 = vadd.f32 0.0, %v471
    %v473 = vpop.f32.mrf.mxu0
    %v474 = vadd.f32 0.0, %v473
    %v475 = vpop.f32.mrf.mxu0
    %v476 = vadd.f32 0.0, %v475
    %v477 = vpop.f32.mrf.mxu0
    %v478 = vadd.f32 0.0, %v477
    %479 = vmatprep.mubr.bf16.mxu0 0
    %480 = vmatmul.mubr.bf16.gmra.mxu0 %v122
    %v481 = vpop.f32.mrf.mxu0
    %v482 = vadd.f32 0.0, %v481
    %v483 = vpop.f32.mrf.mxu0
    %v484 = vadd.f32 0.0, %v483
    %v485 = vpop.f32.mrf.mxu0
    %v486 = vadd.f32 0.0, %v485
    %v487 = vpop.f32.mrf.mxu0
    %v488 = vadd.f32 0.0, %v487
    %489 = vmatprep.mubr.bf16.mxu0 0
    %490 = vmatmul.mubr.bf16.gmra.mxu0 %v123
    %v491 = vpop.f32.mrf.mxu0
    %v492 = vadd.f32 0.0, %v491
    %v493 = vpop.f32.mrf.mxu0
    %v494 = vadd.f32 0.0, %v493
    %v495 = vpop.f32.mrf.mxu0
    %v496 = vadd.f32 0.0, %v495
    %v497 = vpop.f32.mrf.mxu0
    %v498 = vadd.f32 0.0, %v497
    %499 = vmatprep.mubr.bf16.mxu0 0
    %500 = vmatmul.mubr.bf16.gmra.mxu0 %v124
    %v501 = vpop.f32.mrf.mxu0
    %v502 = vadd.f32 0.0, %v501
    %v503 = vpop.f32.mrf.mxu0
    %v504 = vadd.f32 0.0, %v503
    %v505 = vpop.f32.mrf.mxu0
    %v506 = vadd.f32 0.0, %v505
    %v507 = vpop.f32.mrf.mxu0
    %v508 = vadd.f32 0.0, %v507
    %509 = vmatprep.mubr.bf16.mxu0 0
    %510 = vmatmul.mubr.bf16.gmra.mxu0 %v125
    %v511 = vpop.f32.mrf.mxu0
    %v512 = vadd.f32 0.0, %v511
    %v513 = vpop.f32.mrf.mxu0
    %v514 = vadd.f32 0.0, %v513
    %v515 = vpop.f32.mrf.mxu0
    %v516 = vadd.f32 0.0, %v515
    %v517 = vpop.f32.mrf.mxu0
    %v518 = vadd.f32 0.0, %v517
    %519 = vdwg.mxu0
    %v520 = vadd.f32 %v329, %v333
    %v521 = vadd.f32 %v520, %v339
    %v522 = vadd.f32 %v521, %v343
    %v523 = vadd.f32 %v522, %v349
    %v524 = vadd.f32 %v523, %v353
    %v525 = vadd.f32 %v524, %v359
    %v526 = vadd.f32 %v525, %v363
    %v527 = vadd.f32 %v526, %v369
    %v528 = vadd.f32 %v527, %v373
    %v529 = vadd.f32 %v528, %v379
    %v530 = vadd.f32 %v529, %v383
    %v531 = vadd.f32 %v530, %v389
    %v532 = vadd.f32 %v531, %v393
    %v533 = vadd.f32 %v532, %v399
    %v534 = vadd.f32 %v533, %v403
    %v535 = vrot.slane %v534, 4
    %v536 = vadd.f32 %v534, %v535
    %v537 = vrot.slane %v536, 2
    %v538 = vadd.f32 %v536, %v537
    %v539 = vrot.slane %v538, 1
    %v540 = vadd.f32 %v538, %v539
    %v541 = vadd.f32 %v331, %v335
    %v542 = vadd.f32 %v541, %v341
    %v543 = vadd.f32 %v542, %v345
    %v544 = vadd.f32 %v543, %v351
    %v545 = vadd.f32 %v544, %v355
    %v546 = vadd.f32 %v545, %v361
    %v547 = vadd.f32 %v546, %v365
    %v548 = vadd.f32 %v547, %v371
    %v549 = vadd.f32 %v548, %v375
    %v550 = vadd.f32 %v549, %v381
    %v551 = vadd.f32 %v550, %v385
    %v552 = vadd.f32 %v551, %v391
    %v553 = vadd.f32 %v552, %v395
    %v554 = vadd.f32 %v553, %v401
    %v555 = vadd.f32 %v554, %v405
    %v556 = vrot.slane %v555, 4
    %v557 = vadd.f32 %v555, %v556
    %v558 = vrot.slane %v557, 2
    %v559 = vadd.f32 %v557, %v558
    %v560 = vrot.slane %v559, 1
    %v561 = vadd.f32 %v559, %v560
    %v562 = vadd.f32 %v442, %v446
    %v563 = vadd.f32 %v562, %v452
    %v564 = vadd.f32 %v563, %v456
    %v565 = vadd.f32 %v564, %v462
    %v566 = vadd.f32 %v565, %v466
    %v567 = vadd.f32 %v566, %v472
    %v568 = vadd.f32 %v567, %v476
    %v569 = vadd.f32 %v568, %v482
    %v570 = vadd.f32 %v569, %v486
    %v571 = vadd.f32 %v570, %v492
    %v572 = vadd.f32 %v571, %v496
    %v573 = vadd.f32 %v572, %v502
    %v574 = vadd.f32 %v573, %v506
    %v575 = vadd.f32 %v574, %v512
    %v576 = vadd.f32 %v575, %v516
    %v577 = vrot.slane %v576, 4
    %v578 = vadd.f32 %v576, %v577
    %v579 = vrot.slane %v578, 2
    %v580 = vadd.f32 %v578, %v579
    %v581 = vrot.slane %v580, 1
    %v582 = vadd.f32 %v580, %v581
    %v583 = vadd.f32 %v444, %v448
    %v584 = vadd.f32 %v583, %v454
    %v585 = vadd.f32 %v584, %v458
    %v586 = vadd.f32 %v585, %v464
    %v587 = vadd.f32 %v586, %v468
    %v588 = vadd.f32 %v587, %v474
    %v589 = vadd.f32 %v588, %v478
    %v590 = vadd.f32 %v589, %v484
    %v591 = vadd.f32 %v590, %v488
    %v592 = vadd.f32 %v591, %v494
    %v593 = vadd.f32 %v592, %v498
    %v594 = vadd.f32 %v593, %v504
    %v595 = vadd.f32 %v594, %v508
    %v596 = vadd.f32 %v595, %v514
    %v597 = vadd.f32 %v596, %v518
    %v598 = vrot.slane %v597, 4
    %v599 = vadd.f32 %v597, %v598
    %v600 = vrot.slane %v599, 2
    %v601 = vadd.f32 %v599, %v600
    %v602 = vrot.slane %v601, 1
    %v603 = vadd.f32 %v601, %v602
    %v604 = vmul.f32 %v540, 0.0078125
    %v605 = vmul.f32 %v561, 0.0078125
    %v606 = vmul.f32 %v582, 0.0078125
    %v607 = vmul.f32 %v603, 0.0078125
    %v608 = vmul.f32 %v329, %v329
    %v609 = vmul.f32 %v331, %v331
    %v610 = vmul.f32 %v442, %v442
    %v611 = vmul.f32 %v444, %v444
    %v612 = vmul.f32 %v333, %v333
    %v613 = vmul.f32 %v335, %v335
    %v614 = vmul.f32 %v446, %v446
    %v615 = vmul.f32 %v448, %v448
    %v616 = vmul.f32 %v339, %v339
    %v617 = vmul.f32 %v341, %v341
    %v618 = vmul.f32 %v452, %v452
    %v619 = vmul.f32 %v454, %v454
    %v620 = vmul.f32 %v343, %v343
    %v621 = vmul.f32 %v345, %v345
    %v622 = vmul.f32 %v456, %v456
    %v623 = vmul.f32 %v458, %v458
    %v624 = vmul.f32 %v349, %v349
    %v625 = vmul.f32 %v351, %v351
    %v626 = vmul.f32 %v462, %v462
    %v627 = vmul.f32 %v464, %v464
    %v628 = vmul.f32 %v353, %v353
    %v629 = vmul.f32 %v355, %v355
    %v630 = vmul.f32 %v466, %v466
    %v631 = vmul.f32 %v468, %v468
    %v632 = vmul.f32 %v359, %v359
    %v633 = vmul.f32 %v361, %v361
    %v634 = vmul.f32 %v472, %v472
    %v635 = vmul.f32 %v474, %v474
    %v636 = vmul.f32 %v363, %v363
    %v637 = vmul.f32 %v365, %v365
    %v638 = vmul.f32 %v476, %v476
    %v639 = vmul.f32 %v478, %v478
    %v640 = vmul.f32 %v369, %v369
    %v641 = vmul.f32 %v371, %v371
    %v642 = vmul.f32 %v482, %v482
    %v643 = vmul.f32 %v484, %v484
    %v644 = vmul.f32 %v373, %v373
    %v645 = vmul.f32 %v375, %v375
    %v646 = vmul.f32 %v486, %v486
    %v647 = vmul.f32 %v488, %v488
    %v648 = vmul.f32 %v379, %v379
    %v649 = vmul.f32 %v381, %v381
    %v650 = vmul.f32 %v492, %v492
    %v651 = vmul.f32 %v494, %v494
    %v652 = vmul.f32 %v383, %v383
    %v653 = vmul.f32 %v385, %v385
    %v654 = vmul.f32 %v496, %v496
    %v655 = vmul.f32 %v498, %v498
    %v656 = vmul.f32 %v389, %v389
    %v657 = vmul.f32 %v391, %v391
    %v658 = vmul.f32 %v502, %v502
    %v659 = vmul.f32 %v504, %v504
    %v660 = vmul.f32 %v393, %v393
    %v661 = vmul.f32 %v395, %v395
    %v662 = vmul.f32 %v506, %v506
    %v663 = vmul.f32 %v508, %v508
    %v664 = vmul.f32 %v399, %v399
    %v665 = vmul.f32 %v401, %v401
    %v666 = vmul.f32 %v512, %v512
    %v667 = vmul.f32 %v514, %v514
    %v668 = vmul.f32 %v403, %v403
    %v669 = vmul.f32 %v405, %v405
    %v670 = vmul.f32 %v516, %v516
    %v671 = vmul.f32 %v518, %v518
    %v672 = vadd.f32 %v608, %v612
    %v673 = vadd.f32 %v672, %v616
    %v674 = vadd.f32 %v673, %v620
    %v675 = vadd.f32 %v674, %v624
    %v676 = vadd.f32 %v675, %v628
    %v677 = vadd.f32 %v676, %v632
    %v678 = vadd.f32 %v677, %v636
    %v679 = vadd.f32 %v678, %v640
    %v680 = vadd.f32 %v679, %v644
    %v681 = vadd.f32 %v680, %v648
    %v682 = vadd.f32 %v681, %v652
    %v683 = vadd.f32 %v682, %v656
    %v684 = vadd.f32 %v683, %v660
    %v685 = vadd.f32 %v684, %v664
    %v686 = vadd.f32 %v685, %v668
    %v687 = vrot.slane %v686, 4
    %v688 = vadd.f32 %v686, %v687
    %v689 = vrot.slane %v688, 2
    %v690 = vadd.f32 %v688, %v689
    %v691 = vrot.slane %v690, 1
    %v692 = vadd.f32 %v690, %v691
    %v693 = vadd.f32 %v609, %v613
    %v694 = vadd.f32 %v693, %v617
    %v695 = vadd.f32 %v694, %v621
    %v696 = vadd.f32 %v695, %v625
    %v697 = vadd.f32 %v696, %v629
    %v698 = vadd.f32 %v697, %v633
    %v699 = vadd.f32 %v698, %v637
    %v700 = vadd.f32 %v699, %v641
    %v701 = vadd.f32 %v700, %v645
    %v702 = vadd.f32 %v701, %v649
    %v703 = vadd.f32 %v702, %v653
    %v704 = vadd.f32 %v703, %v657
    %v705 = vadd.f32 %v704, %v661
    %v706 = vadd.f32 %v705, %v665
    %v707 = vadd.f32 %v706, %v669
    %v708 = vrot.slane %v707, 4
    %v709 = vadd.f32 %v707, %v708
    %v710 = vrot.slane %v709, 2
    %v711 = vadd.f32 %v709, %v710
    %v712 = vrot.slane %v711, 1
    %v713 = vadd.f32 %v711, %v712
    %v714 = vadd.f32 %v610, %v614
    %v715 = vadd.f32 %v714, %v618
    %v716 = vadd.f32 %v715, %v622
    %v717 = vadd.f32 %v716, %v626
    %v718 = vadd.f32 %v717, %v630
    %v719 = vadd.f32 %v718, %v634
    %v720 = vadd.f32 %v719, %v638
    %v721 = vadd.f32 %v720, %v642
    %v722 = vadd.f32 %v721, %v646
    %v723 = vadd.f32 %v722, %v650
    %v724 = vadd.f32 %v723, %v654
    %v725 = vadd.f32 %v724, %v658
    %v726 = vadd.f32 %v725, %v662
    %v727 = vadd.f32 %v726, %v666
    %v728 = vadd.f32 %v727, %v670
    %v729 = vrot.slane %v728, 4
    %v730 = vadd.f32 %v728, %v729
    %v731 = vrot.slane %v730, 2
    %v732 = vadd.f32 %v730, %v731
    %v733 = vrot.slane %v732, 1
    %v734 = vadd.f32 %v732, %v733
    %v735 = vadd.f32 %v611, %v615
    %v736 = vadd.f32 %v735, %v619
    %v737 = vadd.f32 %v736, %v623
    %v738 = vadd.f32 %v737, %v627
    %v739 = vadd.f32 %v738, %v631
    %v740 = vadd.f32 %v739, %v635
    %v741 = vadd.f32 %v740, %v639
    %v742 = vadd.f32 %v741, %v643
    %v743 = vadd.f32 %v742, %v647
    %v744 = vadd.f32 %v743, %v651
    %v745 = vadd.f32 %v744, %v655
    %v746 = vadd.f32 %v745, %v659
    %v747 = vadd.f32 %v746, %v663
    %v748 = vadd.f32 %v747, %v667
    %v749 = vadd.f32 %v748, %v671
    %v750 = vrot.slane %v749, 4
    %v751 = vadd.f32 %v749, %v750
    %v752 = vrot.slane %v751, 2
    %v753 = vadd.f32 %v751, %v752
    %v754 = vrot.slane %v753, 1
    %v755 = vadd.f32 %v753, %v754
    %v756 = vmul.f32 %v692, 0.0078125
    %v757 = vmul.f32 %v713, 0.0078125
    %v758 = vmul.f32 %v734, 0.0078125
    %v759 = vmul.f32 %v755, 0.0078125
    %v760 = vmul.f32 %v604, %v604
    %v761 = vmul.f32 %v605, %v605
    %v762 = vmul.f32 %v606, %v606
    %v763 = vmul.f32 %v607, %v607
    %v764 = vsub.f32 %v756, %v760
    %v765 = vsub.f32 %v757, %v761
    %v766 = vsub.f32 %v758, %v762
    %v767 = vsub.f32 %v759, %v763
    %v768 = vmax.f32 %v764, 0.0
    %v769 = vmax.f32 %v765, 0.0
    %v770 = vmax.f32 %v766, 0.0
    %v771 = vmax.f32 %v767, 0.0
    %v772 = vld [vmem:[%s2] sm:$0xf]
    %v773 = vadd.f32 %v768, 1e-05
    %v774 = vadd.f32 %v769, 1e-05
    %v775 = vadd.f32 %v770, 1e-05
    %v776 = vadd.f32 %v771, 1e-05
    %v777 = vrsqrt.pop %v773
    %v778 = vrsqrt.pop %v774
    %v779 = vrsqrt.pop %v775
    %v780 = vrsqrt.pop %v776
    %v785 = vcombine.low %v777, %v778
    %v786 = vcombine.low %v779, %v780
    %v788 = vunpack.c.l.s4 1966171168
    %v789 = vunpack.c.0.s8 %v788
    %v790 = vlaneseq
    %v791 = vshrl.u32 %v790, 7
    %v792 = vsub.s32 %v789, %v791
    %v793 = vrot.slane %v785, %v792
    %v795 = vunpack.c.l.s4 1966171168
    %v796 = vunpack.c.0.s8 %v795
    %v797 = vlaneseq
    %v798 = vshrl.u32 %v797, 7
    %v799 = vsub.s32 %v796, %v798
    %v800 = vrot.slane %v786, %v799
    %v801 = vcombine.low %v793, %v800
    %v803 = vunpack.c.l.s4 1966171168
    %v804 = vunpack.c.0.s8 %v803
    %v805 = vlaneseq
    %v806 = vshrl.u32 %v805, 7
    %v807 = vsub.s32 %v804, %v806
    %v808 = vrot.slane %v801, %v807
    %v810 = vmul.f32 %v772, %v808
    %v811 = vld [vmem:[%s3] sm:$0xf]
    %v813 = vlaneseq
    %v814 = vshrl.u32 %v813, 7
    %v815 = vsub.s32 0, %v814
    %v816 = vrot.slane %v810, %v815
    %v817 = vlaneseq
    %v818 = vshrl.u32 %v817, 7
    %v819 = vsub.s32 1, %v818
    %v820 = vrot.slane %v810, %v819
    %v821 = vlaneseq
    %v822 = vshrl.u32 %v821, 7
    %v823 = vsub.s32 2, %v822
    %v824 = vrot.slane %v810, %v823
    %v825 = vlaneseq
    %v826 = vshrl.u32 %v825, 7
    %v827 = vsub.s32 3, %v826
    %v828 = vrot.slane %v810, %v827
    %v833 = vmul.f32 %v604, %v816
    %v834 = vmul.f32 %v605, %v820
    %v835 = vmul.f32 %v606, %v824
    %v836 = vmul.f32 %v607, %v828
    %v841 = vcombine.low %v833, %v834
    %v842 = vcombine.low %v835, %v836
    %v844 = vunpack.c.l.s4 1966171168
    %v845 = vunpack.c.0.s8 %v844
    %v846 = vlaneseq
    %v847 = vshrl.u32 %v846, 7
    %v848 = vsub.s32 %v845, %v847
    %v849 = vrot.slane %v841, %v848
    %v851 = vunpack.c.l.s4 1966171168
    %v852 = vunpack.c.0.s8 %v851
    %v853 = vlaneseq
    %v854 = vshrl.u32 %v853, 7
    %v855 = vsub.s32 %v852, %v854
    %v856 = vrot.slane %v842, %v855
    %v857 = vcombine.low %v849, %v856
    %v859 = vunpack.c.l.s4 1966171168
    %v860 = vunpack.c.0.s8 %v859
    %v861 = vlaneseq
    %v862 = vshrl.u32 %v861, 7
    %v863 = vsub.s32 %v860, %v862
    %v864 = vrot.slane %v857, %v863
    %v866 = vsub.f32 %v811, %v864
    %v867 = vmul.f32 %v329, %v816
    %v868 = vmul.f32 %v331, %v820
    %v869 = vmul.f32 %v442, %v824
    %v870 = vmul.f32 %v444, %v828
    %v871 = vmul.f32 %v333, %v816
    %v872 = vmul.f32 %v335, %v820
    %v873 = vmul.f32 %v446, %v824
    %v874 = vmul.f32 %v448, %v828
    %v875 = vmul.f32 %v339, %v816
    %v876 = vmul.f32 %v341, %v820
    %v877 = vmul.f32 %v452, %v824
    %v878 = vmul.f32 %v454, %v828
    %v879 = vmul.f32 %v343, %v816
    %v880 = vmul.f32 %v345, %v820
    %v881 = vmul.f32 %v456, %v824
    %v882 = vmul.f32 %v458, %v828
    %v883 = vmul.f32 %v349, %v816
    %v884 = vmul.f32 %v351, %v820
    %v885 = vmul.f32 %v462, %v824
    %v886 = vmul.f32 %v464, %v828
    %v887 = vmul.f32 %v353, %v816
    %v888 = vmul.f32 %v355, %v820
    %v889 = vmul.f32 %v466, %v824
    %v890 = vmul.f32 %v468, %v828
    %v891 = vmul.f32 %v359, %v816
    %v892 = vmul.f32 %v361, %v820
    %v893 = vmul.f32 %v472, %v824
    %v894 = vmul.f32 %v474, %v828
    %v895 = vmul.f32 %v363, %v816
    %v896 = vmul.f32 %v365, %v820
    %v897 = vmul.f32 %v476, %v824
    %v898 = vmul.f32 %v478, %v828
    %v899 = vmul.f32 %v369, %v816
    %v900 = vmul.f32 %v371, %v820
    %v901 = vmul.f32 %v482, %v824
    %v902 = vmul.f32 %v484, %v828
    %v903 = vmul.f32 %v373, %v816
    %v904 = vmul.f32 %v375, %v820
    %v905 = vmul.f32 %v486, %v824
    %v906 = vmul.f32 %v488, %v828
    %v907 = vmul.f32 %v379, %v816
    %v908 = vmul.f32 %v381, %v820
    %v909 = vmul.f32 %v492, %v824
    %v910 = vmul.f32 %v494, %v828
    %v911 = vmul.f32 %v383, %v816
    %v912 = vmul.f32 %v385, %v820
    %v913 = vmul.f32 %v496, %v824
    %v914 = vmul.f32 %v498, %v828
    %v915 = vmul.f32 %v389, %v816
    %v916 = vmul.f32 %v391, %v820
    %v917 = vmul.f32 %v502, %v824
    %v918 = vmul.f32 %v504, %v828
    %v919 = vmul.f32 %v393, %v816
    %v920 = vmul.f32 %v395, %v820
    %v921 = vmul.f32 %v506, %v824
    %v922 = vmul.f32 %v508, %v828
    %v923 = vmul.f32 %v399, %v816
    %v924 = vmul.f32 %v401, %v820
    %v925 = vmul.f32 %v512, %v824
    %v926 = vmul.f32 %v514, %v828
    %v927 = vmul.f32 %v403, %v816
    %v928 = vmul.f32 %v405, %v820
    %v929 = vmul.f32 %v516, %v824
    %v930 = vmul.f32 %v518, %v828
    %v932 = vlaneseq
    %v933 = vshrl.u32 %v932, 7
    %v934 = vsub.s32 0, %v933
    %v935 = vrot.slane %v866, %v934
    %v936 = vlaneseq
    %v937 = vshrl.u32 %v936, 7
    %v938 = vsub.s32 1, %v937
    %v939 = vrot.slane %v866, %v938
    %v940 = vlaneseq
    %v941 = vshrl.u32 %v940, 7
    %v942 = vsub.s32 2, %v941
    %v943 = vrot.slane %v866, %v942
    %v944 = vlaneseq
    %v945 = vshrl.u32 %v944, 7
    %v946 = vsub.s32 3, %v945
    %v947 = vrot.slane %v866, %v946
    %v952 = vadd.f32 %v867, %v935
    %v953 = vadd.f32 %v868, %v939
    %v954 = vadd.f32 %v869, %v943
    %v955 = vadd.f32 %v870, %v947
    %v956 = vadd.f32 %v871, %v935
    %v957 = vadd.f32 %v872, %v939
    %v958 = vadd.f32 %v873, %v943
    %v959 = vadd.f32 %v874, %v947
    %v960 = vadd.f32 %v875, %v935
    %v961 = vadd.f32 %v876, %v939
    %v962 = vadd.f32 %v877, %v943
    %v963 = vadd.f32 %v878, %v947
    %v964 = vadd.f32 %v879, %v935
    %v965 = vadd.f32 %v880, %v939
    %v966 = vadd.f32 %v881, %v943
    %v967 = vadd.f32 %v882, %v947
    %v968 = vadd.f32 %v883, %v935
    %v969 = vadd.f32 %v884, %v939
    %v970 = vadd.f32 %v885, %v943
    %v971 = vadd.f32 %v886, %v947
    %v972 = vadd.f32 %v887, %v935
    %v973 = vadd.f32 %v888, %v939
    %v974 = vadd.f32 %v889, %v943
    %v975 = vadd.f32 %v890, %v947
    %v976 = vadd.f32 %v891, %v935
    %v977 = vadd.f32 %v892, %v939
    %v978 = vadd.f32 %v893, %v943
    %v979 = vadd.f32 %v894, %v947
    %v980 = vadd.f32 %v895, %v935
    %v981 = vadd.f32 %v896, %v939
    %v982 = vadd.f32 %v897, %v943
    %v983 = vadd.f32 %v898, %v947
    %v984 = vadd.f32 %v899, %v935
    %v985 = vadd.f32 %v900, %v939
    %v986 = vadd.f32 %v901, %v943
    %v987 = vadd.f32 %v902, %v947
    %v988 = vadd.f32 %v903, %v935
    %v989 = vadd.f32 %v904, %v939
    %v990 = vadd.f32 %v905, %v943
    %v991 = vadd.f32 %v906, %v947
    %v992 = vadd.f32 %v907, %v935
    %v993 = vadd.f32 %v908, %v939
    %v994 = vadd.f32 %v909, %v943
    %v995 = vadd.f32 %v910, %v947
    %v996 = vadd.f32 %v911, %v935
    %v997 = vadd.f32 %v912, %v939
    %v998 = vadd.f32 %v913, %v943
    %v999 = vadd.f32 %v914, %v947
    %v1000 = vadd.f32 %v915, %v935
    %v1001 = vadd.f32 %v916, %v939
    %v1002 = vadd.f32 %v917, %v943
    %v1003 = vadd.f32 %v918, %v947
    %v1004 = vadd.f32 %v919, %v935
    %v1005 = vadd.f32 %v920, %v939
    %v1006 = vadd.f32 %v921, %v943
    %v1007 = vadd.f32 %v922, %v947
    %v1008 = vadd.f32 %v923, %v935
    %v1009 = vadd.f32 %v924, %v939
    %v1010 = vadd.f32 %v925, %v943
    %v1011 = vadd.f32 %v926, %v947
    %v1012 = vadd.f32 %v927, %v935
    %v1013 = vadd.f32 %v928, %v939
    %v1014 = vadd.f32 %v929, %v943
    %v1015 = vadd.f32 %v930, %v947
    %v1016 = vmax.f32 %v952, 0.0
    %v1017 = vmax.f32 %v953, 0.0
    %v1018 = vmax.f32 %v954, 0.0
    %v1019 = vmax.f32 %v955, 0.0
    %v1020 = vmax.f32 %v956, 0.0
    %v1021 = vmax.f32 %v957, 0.0
    %v1022 = vmax.f32 %v958, 0.0
    %v1023 = vmax.f32 %v959, 0.0
    %v1024 = vmax.f32 %v960, 0.0
    %v1025 = vmax.f32 %v961, 0.0
    %v1026 = vmax.f32 %v962, 0.0
    %v1027 = vmax.f32 %v963, 0.0
    %v1028 = vmax.f32 %v964, 0.0
    %v1029 = vmax.f32 %v965, 0.0
    %v1030 = vmax.f32 %v966, 0.0
    %v1031 = vmax.f32 %v967, 0.0
    %v1032 = vmax.f32 %v968, 0.0
    %v1033 = vmax.f32 %v969, 0.0
    %v1034 = vmax.f32 %v970, 0.0
    %v1035 = vmax.f32 %v971, 0.0
    %v1036 = vmax.f32 %v972, 0.0
    %v1037 = vmax.f32 %v973, 0.0
    %v1038 = vmax.f32 %v974, 0.0
    %v1039 = vmax.f32 %v975, 0.0
    %v1040 = vmax.f32 %v976, 0.0
    %v1041 = vmax.f32 %v977, 0.0
    %v1042 = vmax.f32 %v978, 0.0
    %v1043 = vmax.f32 %v979, 0.0
    %v1044 = vmax.f32 %v980, 0.0
    %v1045 = vmax.f32 %v981, 0.0
    %v1046 = vmax.f32 %v982, 0.0
    %v1047 = vmax.f32 %v983, 0.0
    %v1048 = vmax.f32 %v984, 0.0
    %v1049 = vmax.f32 %v985, 0.0
    %v1050 = vmax.f32 %v986, 0.0
    %v1051 = vmax.f32 %v987, 0.0
    %v1052 = vmax.f32 %v988, 0.0
    %v1053 = vmax.f32 %v989, 0.0
    %v1054 = vmax.f32 %v990, 0.0
    %v1055 = vmax.f32 %v991, 0.0
    %v1056 = vmax.f32 %v992, 0.0
    %v1057 = vmax.f32 %v993, 0.0
    %v1058 = vmax.f32 %v994, 0.0
    %v1059 = vmax.f32 %v995, 0.0
    %v1060 = vmax.f32 %v996, 0.0
    %v1061 = vmax.f32 %v997, 0.0
    %v1062 = vmax.f32 %v998, 0.0
    %v1063 = vmax.f32 %v999, 0.0
    %v1064 = vmax.f32 %v1000, 0.0
    %v1065 = vmax.f32 %v1001, 0.0
    %v1066 = vmax.f32 %v1002, 0.0
    %v1067 = vmax.f32 %v1003, 0.0
    %v1068 = vmax.f32 %v1004, 0.0
    %v1069 = vmax.f32 %v1005, 0.0
    %v1070 = vmax.f32 %v1006, 0.0
    %v1071 = vmax.f32 %v1007, 0.0
    %v1072 = vmax.f32 %v1008, 0.0
    %v1073 = vmax.f32 %v1009, 0.0
    %v1074 = vmax.f32 %v1010, 0.0
    %v1075 = vmax.f32 %v1011, 0.0
    %v1076 = vmax.f32 %v1012, 0.0
    %v1077 = vmax.f32 %v1013, 0.0
    %v1078 = vmax.f32 %v1014, 0.0
    %v1079 = vmax.f32 %v1015, 0.0
    %v1080 = vpack.c.bf16 %v1020, %v1016
    %v1081 = vpack.c.bf16 %v1021, %v1017
    %v1082 = vpack.c.bf16 %v1022, %v1018
    %v1083 = vpack.c.bf16 %v1023, %v1019
    %v1084 = vpack.c.bf16 %v1028, %v1024
    %v1085 = vpack.c.bf16 %v1029, %v1025
    %v1086 = vpack.c.bf16 %v1030, %v1026
    %v1087 = vpack.c.bf16 %v1031, %v1027
    %v1088 = vpack.c.bf16 %v1036, %v1032
    %v1089 = vpack.c.bf16 %v1037, %v1033
    %v1090 = vpack.c.bf16 %v1038, %v1034
    %v1091 = vpack.c.bf16 %v1039, %v1035
    %v1092 = vpack.c.bf16 %v1044, %v1040
    %v1093 = vpack.c.bf16 %v1045, %v1041
    %v1094 = vpack.c.bf16 %v1046, %v1042
    %v1095 = vpack.c.bf16 %v1047, %v1043
    %v1096 = vpack.c.bf16 %v1052, %v1048
    %v1097 = vpack.c.bf16 %v1053, %v1049
    %v1098 = vpack.c.bf16 %v1054, %v1050
    %v1099 = vpack.c.bf16 %v1055, %v1051
    %v1100 = vpack.c.bf16 %v1060, %v1056
    %v1101 = vpack.c.bf16 %v1061, %v1057
    %v1102 = vpack.c.bf16 %v1062, %v1058
    %v1103 = vpack.c.bf16 %v1063, %v1059
    %v1104 = vpack.c.bf16 %v1068, %v1064
    %v1105 = vpack.c.bf16 %v1069, %v1065
    %v1106 = vpack.c.bf16 %v1070, %v1066
    %v1107 = vpack.c.bf16 %v1071, %v1067
    %v1108 = vpack.c.bf16 %v1076, %v1072
    %v1109 = vpack.c.bf16 %v1077, %v1073
    %v1110 = vpack.c.bf16 %v1078, %v1074
    %v1111 = vpack.c.bf16 %v1079, %v1075
    %v1112 = vld [vmem:[#allocation2] sm:$0xf]
    %v1113 = vld [vmem:[#allocation2 + $0x4] sm:$0xf]
    %v1114 = vld [vmem:[#allocation2 + $0x8] sm:$0xf]
    %v1115 = vld [vmem:[#allocation2 + $0xc] sm:$0xf]
    %v1116 = vld [vmem:[#allocation2 + $0x10] sm:$0xf]
    %v1117 = vld [vmem:[#allocation2 + $0x14] sm:$0xf]
    %v1118 = vld [vmem:[#allocation2 + $0x18] sm:$0xf]
    %v1119 = vld [vmem:[#allocation2 + $0x1c] sm:$0xf]
    %v1120 = vld [vmem:[#allocation2 + $0x20] sm:$0xf]
    %v1121 = vld [vmem:[#allocation2 + $0x24] sm:$0xf]
    %v1122 = vld [vmem:[#allocation2 + $0x28] sm:$0xf]
    %v1123 = vld [vmem:[#allocation2 + $0x2c] sm:$0xf]
    %v1124 = vld [vmem:[#allocation2 + $0x30] sm:$0xf]
    %v1125 = vld [vmem:[#allocation2 + $0x34] sm:$0xf]
    %v1126 = vld [vmem:[#allocation2 + $0x38] sm:$0xf]
    %v1127 = vld [vmem:[#allocation2 + $0x3c] sm:$0xf]
    %v1128 = vld [vmem:[#allocation2 + $0x40] sm:$0xf]
    %v1129 = vld [vmem:[#allocation2 + $0x44] sm:$0xf]
    %v1130 = vld [vmem:[#allocation2 + $0x48] sm:$0xf]
    %v1131 = vld [vmem:[#allocation2 + $0x4c] sm:$0xf]
    %v1132 = vld [vmem:[#allocation2 + $0x50] sm:$0xf]
    %v1133 = vld [vmem:[#allocation2 + $0x54] sm:$0xf]
    %v1134 = vld [vmem:[#allocation2 + $0x58] sm:$0xf]
    %v1135 = vld [vmem:[#allocation2 + $0x5c] sm:$0xf]
    %v1136 = vld [vmem:[#allocation2 + $0x60] sm:$0xf]
    %v1137 = vld [vmem:[#allocation2 + $0x64] sm:$0xf]
    %v1138 = vld [vmem:[#allocation2 + $0x68] sm:$0xf]
    %v1139 = vld [vmem:[#allocation2 + $0x6c] sm:$0xf]
    %v1140 = vld [vmem:[#allocation2 + $0x70] sm:$0xf]
    %v1141 = vld [vmem:[#allocation2 + $0x74] sm:$0xf]
    %v1142 = vld [vmem:[#allocation2 + $0x78] sm:$0xf]
    %v1143 = vld [vmem:[#allocation2 + $0x7c] sm:$0xf]
    %v1144 = vld [vmem:[#allocation2 + $0x80] sm:$0xf]
    %v1145 = vld [vmem:[#allocation2 + $0x84] sm:$0xf]
    %v1146 = vld [vmem:[#allocation2 + $0x88] sm:$0xf]
    %v1147 = vld [vmem:[#allocation2 + $0x8c] sm:$0xf]
    %v1148 = vld [vmem:[#allocation2 + $0x90] sm:$0xf]
    %v1149 = vld [vmem:[#allocation2 + $0x94] sm:$0xf]
    %v1150 = vld [vmem:[#allocation2 + $0x98] sm:$0xf]
    %v1151 = vld [vmem:[#allocation2 + $0x9c] sm:$0xf]
    %v1152 = vld [vmem:[#allocation2 + $0xa0] sm:$0xf]
    %v1153 = vld [vmem:[#allocation2 + $0xa4] sm:$0xf]
    %v1154 = vld [vmem:[#allocation2 + $0xa8] sm:$0xf]
    %v1155 = vld [vmem:[#allocation2 + $0xac] sm:$0xf]
    %v1156 = vld [vmem:[#allocation2 + $0xb0] sm:$0xf]
    %v1157 = vld [vmem:[#allocation2 + $0xb4] sm:$0xf]
    %v1158 = vld [vmem:[#allocation2 + $0xb8] sm:$0xf]
    %v1159 = vld [vmem:[#allocation2 + $0xbc] sm:$0xf]
    %v1160 = vld [vmem:[#allocation2 + $0xc0] sm:$0xf]
    %v1161 = vld [vmem:[#allocation2 + $0xc4] sm:$0xf]
    %v1162 = vld [vmem:[#allocation2 + $0xc8] sm:$0xf]
    %v1163 = vld [vmem:[#allocation2 + $0xcc] sm:$0xf]
    %v1164 = vld [vmem:[#allocation2 + $0xd0] sm:$0xf]
    %v1165 = vld [vmem:[#allocation2 + $0xd4] sm:$0xf]
    %v1166 = vld [vmem:[#allocation2 + $0xd8] sm:$0xf]
    %v1167 = vld [vmem:[#allocation2 + $0xdc] sm:$0xf]
    %v1168 = vld [vmem:[#allocation2 + $0xe0] sm:$0xf]
    %v1169 = vld [vmem:[#allocation2 + $0xe4] sm:$0xf]
    %v1170 = vld [vmem:[#allocation2 + $0xe8] sm:$0xf]
    %v1171 = vld [vmem:[#allocation2 + $0xec] sm:$0xf]
    %v1172 = vld [vmem:[#allocation2 + $0xf0] sm:$0xf]
    %v1173 = vld [vmem:[#allocation2 + $0xf4] sm:$0xf]
    %v1174 = vld [vmem:[#allocation2 + $0xf8] sm:$0xf]
    %v1175 = vld [vmem:[#allocation2 + $0xfc] sm:$0xf]
    %v1240 = vunpack.c.l.b16 %v1112
    %v1241 = vunpack.c.l.b16 %v1113
    %v1242 = vunpack.c.l.b16 %v1114
    %v1243 = vunpack.c.l.b16 %v1115
    %v1244 = vunpack.c.l.b16 %v1116
    %v1245 = vunpack.c.l.b16 %v1117
    %v1246 = vunpack.c.l.b16 %v1118
    %v1247 = vunpack.c.l.b16 %v1119
    %v1248 = vunpack.c.l.b16 %v1120
    %v1249 = vunpack.c.l.b16 %v1121
    %v1250 = vunpack.c.l.b16 %v1122
    %v1251 = vunpack.c.l.b16 %v1123
    %v1252 = vunpack.c.l.b16 %v1124
    %v1253 = vunpack.c.l.b16 %v1125
    %v1254 = vunpack.c.l.b16 %v1126
    %v1255 = vunpack.c.l.b16 %v1127
    %v1256 = vunpack.c.l.b16 %v1128
    %v1257 = vunpack.c.l.b16 %v1129
    %v1258 = vunpack.c.l.b16 %v1130
    %v1259 = vunpack.c.l.b16 %v1131
    %v1260 = vunpack.c.l.b16 %v1132
    %v1261 = vunpack.c.l.b16 %v1133
    %v1262 = vunpack.c.l.b16 %v1134
    %v1263 = vunpack.c.l.b16 %v1135
    %v1264 = vunpack.c.l.b16 %v1136
    %v1265 = vunpack.c.l.b16 %v1137
    %v1266 = vunpack.c.l.b16 %v1138
    %v1267 = vunpack.c.l.b16 %v1139
    %v1268 = vunpack.c.l.b16 %v1140
    %v1269 = vunpack.c.l.b16 %v1141
    %v1270 = vunpack.c.l.b16 %v1142
    %v1271 = vunpack.c.l.b16 %v1143
    %v1272 = vunpack.c.l.b16 %v1144
    %v1273 = vunpack.c.l.b16 %v1145
    %v1274 = vunpack.c.l.b16 %v1146
    %v1275 = vunpack.c.l.b16 %v1147
    %v1276 = vunpack.c.l.b16 %v1148
    %v1277 = vunpack.c.l.b16 %v1149
    %v1278 = vunpack.c.l.b16 %v1150
    %v1279 = vunpack.c.l.b16 %v1151
    %v1280 = vunpack.c.l.b16 %v1152
    %v1281 = vunpack.c.l.b16 %v1153
    %v1282 = vunpack.c.l.b16 %v1154
    %v1283 = vunpack.c.l.b16 %v1155
    %v1284 = vunpack.c.l.b16 %v1156
    %v1285 = vunpack.c.l.b16 %v1157
    %v1286 = vunpack.c.l.b16 %v1158
    %v1287 = vunpack.c.l.b16 %v1159
    %v1288 = vunpack.c.l.b16 %v1160
    %v1289 = vunpack.c.l.b16 %v1161
    %v1290 = vunpack.c.l.b16 %v1162
    %v1291 = vunpack.c.l.b16 %v1163
    %v1292 = vunpack.c.l.b16 %v1164
    %v1293 = vunpack.c.l.b16 %v1165
    %v1294 = vunpack.c.l.b16 %v1166
    %v1295 = vunpack.c.l.b16 %v1167
    %v1296 = vunpack.c.l.b16 %v1168
    %v1297 = vunpack.c.l.b16 %v1169
    %v1298 = vunpack.c.l.b16 %v1170
    %v1299 = vunpack.c.l.b16 %v1171
    %v1300 = vunpack.c.l.b16 %v1172
    %v1301 = vunpack.c.l.b16 %v1173
    %v1302 = vunpack.c.l.b16 %v1174
    %v1303 = vunpack.c.l.b16 %v1175
    %v1304 = vpack.c.b16 %v1241, %v1240
    %v1305 = vpack.c.b16 %v1243, %v1242
    %v1306 = vpack.c.b16 %v1245, %v1244
    %v1307 = vpack.c.b16 %v1247, %v1246
    %v1308 = vpack.c.b16 %v1249, %v1248
    %v1309 = vpack.c.b16 %v1251, %v1250
    %v1310 = vpack.c.b16 %v1253, %v1252
    %v1311 = vpack.c.b16 %v1255, %v1254
    %v1312 = vpack.c.b16 %v1257, %v1256
    %v1313 = vpack.c.b16 %v1259, %v1258
    %v1314 = vpack.c.b16 %v1261, %v1260
    %v1315 = vpack.c.b16 %v1263, %v1262
    %v1316 = vpack.c.b16 %v1265, %v1264
    %v1317 = vpack.c.b16 %v1267, %v1266
    %v1318 = vpack.c.b16 %v1269, %v1268
    %v1319 = vpack.c.b16 %v1271, %v1270
    %v1320 = vpack.c.b16 %v1273, %v1272
    %v1321 = vpack.c.b16 %v1275, %v1274
    %v1322 = vpack.c.b16 %v1277, %v1276
    %v1323 = vpack.c.b16 %v1279, %v1278
    %v1324 = vpack.c.b16 %v1281, %v1280
    %v1325 = vpack.c.b16 %v1283, %v1282
    %v1326 = vpack.c.b16 %v1285, %v1284
    %v1327 = vpack.c.b16 %v1287, %v1286
    %v1328 = vpack.c.b16 %v1289, %v1288
    %v1329 = vpack.c.b16 %v1291, %v1290
    %v1330 = vpack.c.b16 %v1293, %v1292
    %v1331 = vpack.c.b16 %v1295, %v1294
    %v1332 = vpack.c.b16 %v1297, %v1296
    %v1333 = vpack.c.b16 %v1299, %v1298
    %v1334 = vpack.c.b16 %v1301, %v1300
    %v1335 = vpack.c.b16 %v1303, %v1302
    %1368 = vmatprep.subr.bf16.mxu0 0
    %1369 = vmatpush1.bf16.msra.mxu0 %v1311
    %1370 = vmatprep.subr.bf16.mxu0 0
    %1371 = vmatpush1.bf16.msra.mxu0 %v1310
    %1372 = vmatprep.subr.bf16.mxu0 0
    %1373 = vmatpush1.bf16.msra.mxu0 %v1309
    %1374 = vmatprep.subr.bf16.mxu0 0
    %1375 = vmatpush1.bf16.msra.mxu0 %v1308
    %1376 = vmatprep.subr.bf16.mxu0 0
    %1377 = vmatpush1.bf16.msra.mxu0 %v1307
    %1378 = vmatprep.subr.bf16.mxu0 0
    %1379 = vmatpush1.bf16.msra.mxu0 %v1306
    %1380 = vmatprep.subr.bf16.mxu0 0
    %1381 = vmatpush1.bf16.msra.mxu0 %v1305
    %1382 = vmatprep.subr.bf16.mxu0 0
    %1383 = vmatpush1.bf16.msra.mxu0 %v1304
    %1384 = vmatprep.subr.bf16.mxu0 0
    %1385 = vmatpush2.bf16.msra.mxu0 %v1319
    %1386 = vmatprep.subr.bf16.mxu0 0
    %1387 = vmatpush2.bf16.msra.mxu0 %v1318
    %1388 = vmatprep.subr.bf16.mxu0 0
    %1389 = vmatpush2.bf16.msra.mxu0 %v1317
    %1390 = vmatprep.subr.bf16.mxu0 0
    %1391 = vmatpush2.bf16.msra.mxu0 %v1316
    %1392 = vmatprep.subr.bf16.mxu0 0
    %1393 = vmatpush2.bf16.msra.mxu0 %v1315
    %1394 = vmatprep.subr.bf16.mxu0 0
    %1395 = vmatpush2.bf16.msra.mxu0 %v1314
    %1396 = vmatprep.subr.bf16.mxu0 0
    %1397 = vmatpush2.bf16.msra.mxu0 %v1313
    %1398 = vmatprep.subr.bf16.mxu0 0
    %1399 = vmatpush2.bf16.msra.mxu0 %v1312
    %1400 = vmatprep.mubr.bf16.mxu0 %v1081
    %1401 = vmatmul.mubr.bf16.gmra.mxu0 %v1080
    %v1402 = vpop.f32.mrf.mxu0
    %v1403 = vadd.f32 0.0, %v1402
    %v1404 = vpop.f32.mrf.mxu0
    %v1405 = vpop.f32.mrf.mxu0
    %v1406 = vadd.f32 0.0, %v1405
    %v1407 = vpop.f32.mrf.mxu0
    %1408 = vmatprep.mubr.bf16.mxu0 %v1085
    %1409 = vmatmul.mubr.bf16.gmra.mxu0 %v1084
    %v1410 = vpop.f32.mrf.mxu0
    %v1411 = vadd.f32 0.0, %v1410
    %v1412 = vpop.f32.mrf.mxu0
    %v1413 = vpop.f32.mrf.mxu0
    %v1414 = vadd.f32 0.0, %v1413
    %v1415 = vpop.f32.mrf.mxu0
    %1416 = vmatprep.mubr.bf16.mxu0 %v1089
    %1417 = vmatmul.mubr.bf16.gmra.mxu0 %v1088
    %v1418 = vpop.f32.mrf.mxu0
    %v1419 = vadd.f32 0.0, %v1418
    %v1420 = vpop.f32.mrf.mxu0
    %v1421 = vpop.f32.mrf.mxu0
    %v1422 = vadd.f32 0.0, %v1421
    %v1423 = vpop.f32.mrf.mxu0
    %1424 = vmatprep.mubr.bf16.mxu0 %v1093
    %1425 = vmatmul.mubr.bf16.gmra.mxu0 %v1092
    %v1426 = vpop.f32.mrf.mxu0
    %v1427 = vadd.f32 0.0, %v1426
    %v1428 = vpop.f32.mrf.mxu0
    %v1429 = vpop.f32.mrf.mxu0
    %v1430 = vadd.f32 0.0, %v1429
    %v1431 = vpop.f32.mrf.mxu0
    %1432 = vmatprep.mubr.bf16.mxu0 %v1097
    %1433 = vmatmul.mubr.bf16.gmra.mxu0 %v1096
    %v1434 = vpop.f32.mrf.mxu0
    %v1435 = vadd.f32 0.0, %v1434
    %v1436 = vpop.f32.mrf.mxu0
    %v1437 = vpop.f32.mrf.mxu0
    %v1438 = vadd.f32 0.0, %v1437
    %v1439 = vpop.f32.mrf.mxu0
    %1440 = vmatprep.mubr.bf16.mxu0 %v1101
    %1441 = vmatmul.mubr.bf16.gmra.mxu0 %v1100
    %v1442 = vpop.f32.mrf.mxu0
    %v1443 = vadd.f32 0.0, %v1442
    %v1444 = vpop.f32.mrf.mxu0
    %v1445 = vpop.f32.mrf.mxu0
    %v1446 = vadd.f32 0.0, %v1445
    %v1447 = vpop.f32.mrf.mxu0
    %1448 = vmatprep.mubr.bf16.mxu0 %v1105
    %1449 = vmatmul.mubr.bf16.gmra.mxu0 %v1104
    %v1450 = vpop.f32.mrf.mxu0
    %v1451 = vadd.f32 0.0, %v1450
    %v1452 = vpop.f32.mrf.mxu0
    %v1453 = vpop.f32.mrf.mxu0
    %v1454 = vadd.f32 0.0, %v1453
    %v1455 = vpop.f32.mrf.mxu0
    %1456 = vmatprep.mubr.bf16.mxu0 %v1109
    %1457 = vmatmul.mubr.bf16.gmra.mxu0 %v1108
    %v1458 = vpop.f32.mrf.mxu0
    %v1459 = vadd.f32 0.0, %v1458
    %v1460 = vpop.f32.mrf.mxu0
    %v1461 = vpop.f32.mrf.mxu0
    %v1462 = vadd.f32 0.0, %v1461
    %v1463 = vpop.f32.mrf.mxu0
    %1464 = vdwg.mxu0
    %1465 = vmatprep.subr.bf16.mxu0 0
    %1466 = vmatpush1.bf16.msra.mxu0 %v1327
    %1467 = vmatprep.subr.bf16.mxu0 0
    %1468 = vmatpush1.bf16.msra.mxu0 %v1326
    %1469 = vmatprep.subr.bf16.mxu0 0
    %1470 = vmatpush1.bf16.msra.mxu0 %v1325
    %1471 = vmatprep.subr.bf16.mxu0 0
    %1472 = vmatpush1.bf16.msra.mxu0 %v1324
    %1473 = vmatprep.subr.bf16.mxu0 0
    %1474 = vmatpush1.bf16.msra.mxu0 %v1323
    %1475 = vmatprep.subr.bf16.mxu0 0
    %1476 = vmatpush1.bf16.msra.mxu0 %v1322
    %1477 = vmatprep.subr.bf16.mxu0 0
    %1478 = vmatpush1.bf16.msra.mxu0 %v1321
    %1479 = vmatprep.subr.bf16.mxu0 0
    %1480 = vmatpush1.bf16.msra.mxu0 %v1320
    %1481 = vmatprep.subr.bf16.mxu0 0
    %1482 = vmatpush2.bf16.msra.mxu0 %v1335
    %1483 = vmatprep.subr.bf16.mxu0 0
    %1484 = vmatpush2.bf16.msra.mxu0 %v1334
    %1485 = vmatprep.subr.bf16.mxu0 0
    %1486 = vmatpush2.bf16.msra.mxu0 %v1333
    %1487 = vmatprep.subr.bf16.mxu0 0
    %1488 = vmatpush2.bf16.msra.mxu0 %v1332
    %1489 = vmatprep.subr.bf16.mxu0 0
    %1490 = vmatpush2.bf16.msra.mxu0 %v1331
    %1491 = vmatprep.subr.bf16.mxu0 0
    %1492 = vmatpush2.bf16.msra.mxu0 %v1330
    %1493 = vmatprep.subr.bf16.mxu0 0
    %1494 = vmatpush2.bf16.msra.mxu0 %v1329
    %1495 = vmatprep.subr.bf16.mxu0 0
    %1496 = vmatpush2.bf16.msra.mxu0 %v1328
    %1497 = vmatprep.mubr.bf16.mxu0 %v1083
    %1498 = vmatmul.mubr.bf16.gmra.mxu0 %v1082
    %v1499 = vpop.f32.mrf.mxu0
    %v1500 = vadd.f32 %v1403, %v1499
    %v1501 = vpop.f32.mrf.mxu0
    %v1502 = vpop.f32.mrf.mxu0
    %v1503 = vadd.f32 %v1406, %v1502
    %v1504 = vpop.f32.mrf.mxu0
    %1505 = vmatprep.mubr.bf16.mxu0 %v1087
    %1506 = vmatmul.mubr.bf16.gmra.mxu0 %v1086
    %v1507 = vpop.f32.mrf.mxu0
    %v1508 = vadd.f32 %v1411, %v1507
    %v1509 = vpop.f32.mrf.mxu0
    %v1510 = vpop.f32.mrf.mxu0
    %v1511 = vadd.f32 %v1414, %v1510
    %v1512 = vpop.f32.mrf.mxu0
    %1513 = vmatprep.mubr.bf16.mxu0 %v1091
    %1514 = vmatmul.mubr.bf16.gmra.mxu0 %v1090
    %v1515 = vpop.f32.mrf.mxu0
    %v1516 = vadd.f32 %v1419, %v1515
    %v1517 = vpop.f32.mrf.mxu0
    %v1518 = vpop.f32.mrf.mxu0
    %v1519 = vadd.f32 %v1422, %v1518
    %v1520 = vpop.f32.mrf.mxu0
    %1521 = vmatprep.mubr.bf16.mxu0 %v1095
    %1522 = vmatmul.mubr.bf16.gmra.mxu0 %v1094
    %v1523 = vpop.f32.mrf.mxu0
    %v1524 = vadd.f32 %v1427, %v1523
    %v1525 = vpop.f32.mrf.mxu0
    %v1526 = vpop.f32.mrf.mxu0
    %v1527 = vadd.f32 %v1430, %v1526
    %v1528 = vpop.f32.mrf.mxu0
    %1529 = vmatprep.mubr.bf16.mxu0 %v1099
    %1530 = vmatmul.mubr.bf16.gmra.mxu0 %v1098
    %v1531 = vpop.f32.mrf.mxu0
    %v1532 = vadd.f32 %v1435, %v1531
    %v1533 = vpop.f32.mrf.mxu0
    %v1534 = vpop.f32.mrf.mxu0
    %v1535 = vadd.f32 %v1438, %v1534
    %v1536 = vpop.f32.mrf.mxu0
    %1537 = vmatprep.mubr.bf16.mxu0 %v1103
    %1538 = vmatmul.mubr.bf16.gmra.mxu0 %v1102
    %v1539 = vpop.f32.mrf.mxu0
    %v1540 = vadd.f32 %v1443, %v1539
    %v1541 = vpop.f32.mrf.mxu0
    %v1542 = vpop.f32.mrf.mxu0
    %v1543 = vadd.f32 %v1446, %v1542
    %v1544 = vpop.f32.mrf.mxu0
    %1545 = vmatprep.mubr.bf16.mxu0 %v1107
    %1546 = vmatmul.mubr.bf16.gmra.mxu0 %v1106
    %v1547 = vpop.f32.mrf.mxu0
    %v1548 = vadd.f32 %v1451, %v1547
    %v1549 = vpop.f32.mrf.mxu0
    %v1550 = vpop.f32.mrf.mxu0
    %v1551 = vadd.f32 %v1454, %v1550
    %v1552 = vpop.f32.mrf.mxu0
    %1553 = vmatprep.mubr.bf16.mxu0 %v1111
    %1554 = vmatmul.mubr.bf16.gmra.mxu0 %v1110
    %v1555 = vpop.f32.mrf.mxu0
    %v1556 = vadd.f32 %v1459, %v1555
    %v1557 = vpop.f32.mrf.mxu0
    %v1558 = vpop.f32.mrf.mxu0
    %v1559 = vadd.f32 %v1462, %v1558
    %v1560 = vpop.f32.mrf.mxu0
    %1561 = vdwg.mxu0
    %p1562 = scmp.eq.s32.totalorder 0, 0
    // Predicated region
    $region30: #{_forward_padded.1} parent=1 // pred_check
      %p1563 = pneg %p1562
    $region31: #{_forward_padded.1} parent=1 // pred_check_branch
      %1565 = sbr.rel (%p1563) target = $region33
    $region32: #{_forward_padded.1} parent=1 // pred_region
      %v1566 = vld [vmem:[%s5] sm:$0x1]
      %v1568 = vlaneseq
      %v1569 = vshrl.u32 %v1568, 7
      %v1570 = vsub.s32 0, %v1569
      %v1571 = vrot.slane %v1566, %v1570
      %v1573 = vadd.f32 %v1500, %v1571
      %v1574 = vadd.f32 %v1503, %v1571
      %v1575 = vadd.f32 %v1508, %v1571
      %v1576 = vadd.f32 %v1511, %v1571
      %v1577 = vadd.f32 %v1516, %v1571
      %v1578 = vadd.f32 %v1519, %v1571
      %v1579 = vadd.f32 %v1524, %v1571
      %v1580 = vadd.f32 %v1527, %v1571
      %v1581 = vadd.f32 %v1532, %v1571
      %v1582 = vadd.f32 %v1535, %v1571
      %v1583 = vadd.f32 %v1540, %v1571
      %v1584 = vadd.f32 %v1543, %v1571
      %v1585 = vadd.f32 %v1548, %v1571
      %v1586 = vadd.f32 %v1551, %v1571
      %v1587 = vadd.f32 %v1556, %v1571
      %v1588 = vadd.f32 %v1559, %v1571
      %1589 = vst [vmem:[%s6] sm:$0xff] %v1573
      %1590 = vst [vmem:[%s6 + $0x8] sm:$0xff] %v1574
      %1591 = vst [vmem:[%s6 + $0x10] sm:$0xff] %v1575
      %1592 = vst [vmem:[%s6 + $0x18] sm:$0xff] %v1576
      %1593 = vst [vmem:[%s6 + $0x20] sm:$0xff] %v1577
      %1594 = vst [vmem:[%s6 + $0x28] sm:$0xff] %v1578
      %1595 = vst [vmem:[%s6 + $0x30] sm:$0xff] %v1579
      %1596 = vst [vmem:[%s6 + $0x38] sm:$0xff] %v1580
      %1597 = vst [vmem:[%s6 + $0x40] sm:$0xff] %v1581
      %1598 = vst [vmem:[%s6 + $0x48] sm:$0xff] %v1582
      %1599 = vst [vmem:[%s6 + $0x50] sm:$0xff] %v1583
      %1600 = vst [vmem:[%s6 + $0x58] sm:$0xff] %v1584
      %1601 = vst [vmem:[%s6 + $0x60] sm:$0xff] %v1585
      %1602 = vst [vmem:[%s6 + $0x68] sm:$0xff] %v1586
      %1603 = vst [vmem:[%s6 + $0x70] sm:$0xff] %v1587
      %1604 = vst [vmem:[%s6 + $0x78] sm:$0xff] %v1588
    $region33: #{_forward_padded.1} parent=1 // pred_fallthru
      _
    %p1605 = scmp.gt.s32.totalorder 0, 0
    // Predicated region
    $region34: #{_forward_padded.1} parent=1 // pred_check
      %p1606 = pneg %p1605
    $region35: #{_forward_padded.1} parent=1 // pred_check_branch
      %1608 = sbr.rel (%p1606) target = $region37
    $region36: #{_forward_padded.1} parent=1 // pred_region
      %v1609 = vld [vmem:[%s6] sm:$0xff]
      %v1610 = vld [vmem:[%s6 + $0x8] sm:$0xff]
      %v1611 = vld [vmem:[%s6 + $0x10] sm:$0xff]
      %v1612 = vld [vmem:[%s6 + $0x18] sm:$0xff]
      %v1613 = vld [vmem:[%s6 + $0x20] sm:$0xff]
      %v1614 = vld [vmem:[%s6 + $0x28] sm:$0xff]
      %v1615 = vld [vmem:[%s6 + $0x30] sm:$0xff]
      %v1616 = vld [vmem:[%s6 + $0x38] sm:$0xff]
      %v1617 = vld [vmem:[%s6 + $0x40] sm:$0xff]
      %v1618 = vld [vmem:[%s6 + $0x48] sm:$0xff]
      %v1619 = vld [vmem:[%s6 + $0x50] sm:$0xff]
      %v1620 = vld [vmem:[%s6 + $0x58] sm:$0xff]
      %v1621 = vld [vmem:[%s6 + $0x60] sm:$0xff]
      %v1622 = vld [vmem:[%s6 + $0x68] sm:$0xff]
      %v1623 = vld [vmem:[%s6 + $0x70] sm:$0xff]
      %v1624 = vld [vmem:[%s6 + $0x78] sm:$0xff]
      %v1625 = vadd.f32 %v1609, %v1500
      %v1626 = vadd.f32 %v1610, %v1503
      %v1627 = vadd.f32 %v1611, %v1508
      %v1628 = vadd.f32 %v1612, %v1511
      %v1629 = vadd.f32 %v1613, %v1516
      %v1630 = vadd.f32 %v1614, %v1519
      %v1631 = vadd.f32 %v1615, %v1524
      %v1632 = vadd.f32 %v1616, %v1527
      %v1633 = vadd.f32 %v1617, %v1532
      %v1634 = vadd.f32 %v1618, %v1535
      %v1635 = vadd.f32 %v1619, %v1540
      %v1636 = vadd.f32 %v1620, %v1543
      %v1637 = vadd.f32 %v1621, %v1548
      %v1638 = vadd.f32 %v1622, %v1551
      %v1639 = vadd.f32 %v1623, %v1556
      %v1640 = vadd.f32 %v1624, %v1559
      %1641 = vst [vmem:[%s6] sm:$0xff] %v1625
      %1642 = vst [vmem:[%s6 + $0x8] sm:$0xff] %v1626
      %1643 = vst [vmem:[%s6 + $0x10] sm:$0xff] %v1627
      %1644 = vst [vmem:[%s6 + $0x18] sm:$0xff] %v1628
      %1645 = vst [vmem:[%s6 + $0x20] sm:$0xff] %v1629
      %1646 = vst [vmem:[%s6 + $0x28] sm:$0xff] %v1630
      %1647 = vst [vmem:[%s6 + $0x30] sm:$0xff] %v1631
      %1648 = vst [vmem:[%s6 + $0x38] sm:$0xff] %v1632
      %1649 = vst [vmem:[%s6 + $0x40] sm:$0xff] %v1633
      %1650 = vst [vmem:[%s6 + $0x48] sm:$0xff] %v1634
      %1651 = vst [vmem:[%s6 + $0x50] sm:$0xff] %v1635
      %1652 = vst [vmem:[%s6 + $0x58] sm:$0xff] %v1636
      %1653 = vst [vmem:[%s6 + $0x60] sm:$0xff] %v1637
      %1654 = vst [vmem:[%s6 + $0x68] sm:$0xff] %v1638
      %1655 = vst [vmem:[%s6 + $0x70] sm:$0xff] %v1639
      %1656 = vst [vmem:[%s6 + $0x78] sm:$0xff] %v1640
    $region37: #{_forward_padded.1} parent=1 // pred_fallthru
      _
    // Predicated region
    $region38: #{_forward_padded.1} parent=1 // pred_check
      _
    $region39: #{_forward_padded.1} parent=1 // pred_check_branch
      %1658 = sbr.rel (0) target = $region41
    $region40: #{_forward_padded.1} parent=1 // pred_region
      _
    $region41: #{_forward_padded.1} parent=1 // pred_fallthru
      _
    // Predicated region
    $region42: #{_forward_padded.1} parent=1 // pred_check
      _
    $region43: #{_forward_padded.1} parent=1 // pred_check_branch
      %1660 = sbr.rel (0) target = $region45
    $region44: #{_forward_padded.1} parent=1 // pred_region
      _
    $region45: #{_forward_padded.1} parent=1 // pred_fallthru
      _
    %1661 = vsyncpa [#allocation3], 1

</llo_original>
